<compile_context>
chip_gen: v5e
topology: v5e:2x2
jax: 0.10.0
libtpu: 0.0.40
codegen_flags: <defaults>
</compile_context>

<pallas_src>
import functools

import jax
import jax.numpy as jnp
from jax import lax
from jax.experimental import pallas as pl
from jax.experimental.pallas import tpu as pltpu

EPS = 1e-5          # PyTorch BatchNorm1d default eps
HIDDEN = 256        # hidden width fixed by the module
LANE = 128          # TPU lane width


def _round_up(n, m):
    return (n + m - 1) // m * m


def _ae_kernel(x_ref, w1_ref, vec_ref, w23_ref, w4_ref, b4_ref, out_ref,
               s1_ref, s2_ref, ss1_ref, ss2_ref, *, batch_size, tile_b):
    """Grid = (3 phases, batch tiles).  vec_ref rows: 0=b1 1=g1 2=be1 3=b23 4=g2 5=be2."""
    p = pl.program_id(0)   # phase
    t = pl.program_id(1)   # batch tile
    inv_batch = 1.0 / batch_size

    # Rows past the true batch are zero-padded in the wrapper; mask them out of the
    # BatchNorm statistics (their h would otherwise contribute the bias b1).
    rows = lax.broadcasted_iota(jnp.int32, (tile_b, 1), 0) + t * tile_b
    mask = (rows < batch_size).astype(jnp.float32)            # (tile_b, 1)

    # Every phase needs h = x @ w1 + b1 (bf16 MXU matmul, fp32 accumulation).
    h = jnp.dot(x_ref[...], w1_ref[...],
                preferred_element_type=jnp.float32) + vec_ref[0:1, :]

    @pl.when(p == 0)
    def _phase0():   # accumulate full-batch sum / sum-of-squares of h
        @pl.when(t == 0)
        def _():
            s1_ref[...] = jnp.zeros_like(s1_ref)
        hm = h * mask
        s1_ref[0:1, :] = s1_ref[0:1, :] + jnp.sum(hm, axis=0, keepdims=True)
        s1_ref[1:2, :] = s1_ref[1:2, :] + jnp.sum(hm * h, axis=0, keepdims=True)

    @pl.when(p == 1)
    def _phase1():   # BN1 + ReLU, d = hn @ (w2 @ w3) + b23, accumulate stats of d
        @pl.when(t == 0)
        def _():
            # Fold BN1 into a single scale/shift (biased variance, training mode).
            mean = s1_ref[0:1, :] * inv_batch
            var = s1_ref[1:2, :] * inv_batch - mean * mean
            scale = vec_ref[1:2, :] * lax.rsqrt(var + EPS)
            ss1_ref[0:1, :] = scale
            ss1_ref[1:2, :] = vec_ref[2:3, :] - mean * scale
            s2_ref[...] = jnp.zeros_like(s2_ref)
        hn = jnp.maximum(h * ss1_ref[0:1, :] + ss1_ref[1:2, :], 0.0)
        d = jnp.dot(hn.astype(jnp.bfloat16), w23_ref[...],
                    preferred_element_type=jnp.float32) + vec_ref[3:4, :]
        dm = d * mask
        s2_ref[0:1, :] = s2_ref[0:1, :] + jnp.sum(dm, axis=0, keepdims=True)
        s2_ref[1:2, :] = s2_ref[1:2, :] + jnp.sum(dm * d, axis=0, keepdims=True)

    @pl.when(p == 2)
    def _phase2():   # BN2 + ReLU, r = ReLU(dn @ w4 + b4), store the output tile
        @pl.when(t == 0)
        def _():
            mean = s2_ref[0:1, :] * inv_batch
            var = s2_ref[1:2, :] * inv_batch - mean * mean
            scale = vec_ref[4:5, :] * lax.rsqrt(var + EPS)
            ss2_ref[0:1, :] = scale
            ss2_ref[1:2, :] = vec_ref[5:6, :] - mean * scale
        hn = jnp.maximum(h * ss1_ref[0:1, :] + ss1_ref[1:2, :], 0.0)
        d = jnp.dot(hn.astype(jnp.bfloat16), w23_ref[...],
                    preferred_element_type=jnp.float32) + vec_ref[3:4, :]
        dn = jnp.maximum(d * ss2_ref[0:1, :] + ss2_ref[1:2, :], 0.0)
        r = jnp.dot(dn.astype(jnp.bfloat16), w4_ref[...],
                    preferred_element_type=jnp.float32) + b4_ref[...]
        out_ref[...] = jnp.maximum(r, 0.0)


def prepare_params(params):
    """One-time preprocessing: fuse Linear(256,emb)->Linear(emb,256), lane-pad the
    input/output feature dim to a multiple of 128, pack the six (1,256) vectors into
    one array, and cast the matmul weights to bf16 (accumulation stays fp32)."""
    input_size = params["w1"].shape[0]
    padded = _round_up(input_size, LANE)

    w23 = params["w2"] @ params["w3"]                   # [256, 256]
    b23 = params["b2"] @ params["w3"] + params["b3"]    # [1, 256]

    w1p = jnp.zeros((padded, HIDDEN), jnp.float32).at[:input_size, :].set(params["w1"])
    w4p = jnp.zeros((HIDDEN, padded), jnp.float32).at[:, :input_size].set(params["w4"])
    b4p = jnp.zeros((1, padded), jnp.float32).at[:, :input_size].set(params["b4"])
    vec = jnp.concatenate([params["b1"], params["g1"], params["be1"],
                           b23, params["g2"], params["be2"]], axis=0)   # [6, 256]

    return {
        "w1": w1p.astype(jnp.bfloat16),
        "w23": w23.astype(jnp.bfloat16),
        "w4": w4p.astype(jnp.bfloat16),
        "b4": b4p,
        "vec": vec,
    }


@functools.partial(jax.jit, static_argnames=("max_tile_rows",))
def dense_autoencoder_forward(x, prepped, max_tile_rows=512):
    """x: [B, input_size] float32 -> reconstructions [B, input_size] float32."""
    B, input_size = x.shape
    padded = prepped["w1"].shape[0]

    # Batch tile: multiple of 8 sublanes; the batch is zero-padded up to a multiple of
    # the tile and padded rows are masked out of the BN statistics in the kernel.
    cap = max(8, (min(max_tile_rows, 512) // 8) * 8)
    tile_b = min(cap, _round_up(B, 8))
    num_tiles = pl.cdiv(B, tile_b)
    b_pad = num_tiles * tile_b

    # Lane-pad x and cast activations to bf16 (halves x DMA, matches MXU dtype).
    xp = jnp.zeros((b_pad, padded), jnp.bfloat16).at[:B, :input_size].set(
        x.astype(jnp.bfloat16))

    kernel = functools.partial(_ae_kernel, batch_size=B, tile_b=tile_b)
    res_spec = lambda shape: pl.BlockSpec(shape, lambda p, t: (0, 0))  # VMEM-resident

    out_padded = pl.pallas_call(
        kernel,
        out_shape=jax.ShapeDtypeStruct((b_pad, padded), jnp.float32),
        grid_spec=pltpu.PrefetchScalarGridSpec(
            num_scalar_prefetch=0,
            grid=(3, num_tiles),                                       # (phase, tile)
            in_specs=[
                pl.BlockSpec((tile_b, padded), lambda p, t: (t, 0)),   # x tile (bf16)
                res_spec((padded, HIDDEN)),                            # w1      (bf16)
                res_spec((6, HIDDEN)),                                 # packed vectors
                res_spec((HIDDEN, HIDDEN)),                            # w2 @ w3 (bf16)
                res_spec((HIDDEN, padded)),                            # w4      (bf16)
                res_spec((1, padded)),                                 # b4
            ],
            # Output is only produced in phase 2; keep the block index frozen at 0
            # during phases 0/1 so no block is flushed before real data is written.
            out_specs=pl.BlockSpec((tile_b, padded),
                                   lambda p, t: (jnp.where(p == 2, t, 0), 0)),
            scratch_shapes=[
                pltpu.VMEM((2, HIDDEN), jnp.float32),   # sum / sumsq of h
                pltpu.VMEM((2, HIDDEN), jnp.float32),   # sum / sumsq of d
                pltpu.VMEM((2, HIDDEN), jnp.float32),   # BN1 scale / shift
                pltpu.VMEM((2, HIDDEN), jnp.float32),   # BN2 scale / shift
            ],
        ),
        compiler_params=pltpu.CompilerParams(
            # Both axes 'arbitrary': training-mode BatchNorm needs exact full-batch
            # statistics, so batch tiles must accumulate sequentially into scratch.
            dimension_semantics=("arbitrary", "arbitrary"),
            vmem_limit_bytes=32 * 1024 * 1024,
        ),
    )(xp, prepped["w1"], prepped["vec"], prepped["w23"], prepped["w4"], prepped["b4"])

    return out_padded[:B, :input_size]


def init_params(key, input_size, emb_size=32, hidden=HIDDEN):
    """Deterministic init mimicking PyTorch nn.Linear defaults (U(+-1/sqrt(fan_in)))."""
    ks = jax.random.split(key, 4)

    def lin(k, fan_in, fan_out):
        kw, kb = jax.random.split(k)
        bound = 1.0 / jnp.sqrt(fan_in)
        w = jax.random.uniform(kw, (fan_in, fan_out), jnp.float32, -bound, bound)
        b = jax.random.uniform(kb, (1, fan_out), jnp.float32, -bound, bound)
        return w, b

    w1, b1 = lin(ks[0], input_size, hidden)
    w2, b2 = lin(ks[1], hidden, emb_size)
    w3, b3 = lin(ks[2], emb_size, hidden)
    w4, b4 = lin(ks[3], hidden, input_size)
    ones = jnp.ones((1, hidden), jnp.float32)
    zeros = jnp.zeros((1, hidden), jnp.float32)
    # TODO(synk): BatchNorm running_mean/running_var buffer updates (a training-time
    # side effect of forward()) are not materialized; they do not affect the output.
    return {"w1": w1, "b1": b1, "g1": ones, "be1": zeros,
            "w2": w2, "b2": b2, "w3": w3, "b3": b3,
            "g2": ones, "be2": zeros, "w4": w4, "b4": b4}


def _reference_forward(x, params):
    """Pure-JAX reference replicating the kernel math (bf16 matmul inputs, fp32
    accumulation, fused w2@w3, folded single-pass training-mode BatchNorm)."""
    def bdot(a, b):
        return jnp.dot(a.astype(jnp.bfloat16), b.astype(jnp.bfloat16),
                       preferred_element_type=jnp.float32)

    w23 = params["w2"] @ params["w3"]
    b23 = params["b2"] @ params["w3"] + params["b3"]

    h = bdot(x, params["w1"]) + params["b1"]
    mu = jnp.mean(h, axis=0, keepdims=True)
    var = jnp.mean(h * h, axis=0, keepdims=True) - mu * mu
    s = params["g1"] * lax.rsqrt(var + EPS)
    hn = jnp.maximum(h * s + (params["be1"] - mu * s), 0.0)

    d = bdot(hn, w23) + b23
    mu2 = jnp.mean(d, axis=0, keepdims=True)
    var2 = jnp.mean(d * d, axis=0, keepdims=True) - mu2 * mu2
    s2 = params["g2"] * lax.rsqrt(var2 + EPS)
    dn = jnp.maximum(d * s2 + (params["be2"] - mu2 * s2), 0.0)

    return jnp.maximum(bdot(dn, params["w4"]) + params["b4"], 0.0)


if __name__ == "__main__":
    key = jax.random.PRNGKey(0)
    k_x, k_x2, k_p = jax.random.split(key, 3)

    INPUT_SIZE, EMB = 64, 32
    params = init_params(k_p, INPUT_SIZE, EMB)
    prepped = prepare_params(params)

    # Case 1: B=16 with max_tile_rows=8 -> two full batch tiles, exercising the
    # cross-tile BatchNorm-statistics accumulation path.
    x1 = jax.random.normal(k_x, (16, INPUT_SIZE), jnp.float32)
    out1 = jax.block_until_ready(dense_autoencoder_forward(x1, prepped, max_tile_rows=8))
    ref1 = _reference_forward(x1, params)
    assert out1.shape == (16, INPUT_SIZE)
    # bf16 matmuls + EUP rsqrt make bit-exactness impossible; 5e-3 still catches bugs.
    assert jnp.allclose(out1, ref1, atol=5e-3, rtol=5e-3), float(
        jnp.max(jnp.abs(out1 - ref1)))

    # Case 2: B=13 (not a multiple of 8) -> exercises the padded-row masking of the
    # BatchNorm statistics.
    x2 = jax.random.normal(k_x2, (13, INPUT_SIZE), jnp.float32)
    out2 = jax.block_until_ready(dense_autoencoder_forward(x2, prepped, max_tile_rows=8))
    ref2 = _reference_forward(x2, params)
    assert out2.shape == (13, INPUT_SIZE)
    assert jnp.allclose(out2, ref2, atol=5e-3, rtol=5e-3), float(
        jnp.max(jnp.abs(out2 - ref2)))

    print("KERNEL_OK")
</pallas_src>

<mosaic_0001>
module attributes {stable_mosaic.version = 11 : i64} {
  func.func @_ae_kernel(%arg0: i32, %arg1: i32, %arg2: memref<8x128xbf16, #tpu.memory_space<vmem>>, %arg3: memref<128x256xbf16, #tpu.memory_space<vmem>>, %arg4: memref<6x256xf32, #tpu.memory_space<vmem>>, %arg5: memref<256x256xbf16, #tpu.memory_space<vmem>>, %arg6: memref<256x128xbf16, #tpu.memory_space<vmem>>, %arg7: memref<1x128xf32, #tpu.memory_space<vmem>>, %arg8: memref<8x128xf32, #tpu.memory_space<vmem>>, %arg9: memref<2x256xf32, #tpu.memory_space<vmem>>, %arg10: memref<2x256xf32, #tpu.memory_space<vmem>>, %arg11: memref<2x256xf32, #tpu.memory_space<vmem>>, %arg12: memref<2x256xf32, #tpu.memory_space<vmem>>) attributes {dimension_semantics = [#tpu.dimension_semantics<arbitrary>, #tpu.dimension_semantics<arbitrary>], iteration_bounds = array<i64: 3, 2>, scalar_prefetch = 0 : i64, scratch_operands = 4 : i64, tpu.core_type = #tpu.core_type<tc>, window_params = [{transform_indices = @transform_0, window_bounds = array<i64: 8, 128>}, {pipeline_mode = #tpu.pipeline_mode<synchronous>, transform_indices = @transform_1, window_bounds = array<i64: 128, 256>}, {pipeline_mode = #tpu.pipeline_mode<synchronous>, transform_indices = @transform_2, window_bounds = array<i64: 6, 256>}, {pipeline_mode = #tpu.pipeline_mode<synchronous>, transform_indices = @transform_3, window_bounds = array<i64: 256, 256>}, {pipeline_mode = #tpu.pipeline_mode<synchronous>, transform_indices = @transform_4, window_bounds = array<i64: 256, 128>}, {pipeline_mode = #tpu.pipeline_mode<synchronous>, transform_indices = @transform_5, window_bounds = array<i64: 1, 128>}, {transform_indices = @transform_6, window_bounds = array<i64: 8, 128>}]} {
    %0 = tpu.iota {dimensions = array<i32: 0>} : vector<8x1xi32>
    %c8_i32 = arith.constant 8 : i32
    %1 = arith.muli %arg1, %c8_i32 : i32
    %2 = vector.broadcast %1 : i32 to vector<8x1xi32>
    %3 = arith.addi %0, %2 : vector<8x1xi32>
    %c16_i32 = arith.constant 16 : i32
    %4 = vector.broadcast %c16_i32 : i32 to vector<8x1xi32>
    %5 = arith.cmpi slt, %3, %4 : vector<8x1xi32>
    %6 = arith.extui %5 : vector<8x1xi1> to vector<8x1xi32>
    %7 = arith.sitofp %6 : vector<8x1xi32> to vector<8x1xf32>
    %c0 = arith.constant 0 : index
    %c0_0 = arith.constant 0 : index
    %8 = vector.load %arg2[%c0, %c0_0] : memref<8x128xbf16, #tpu.memory_space<vmem>>, vector<8x128xbf16>
    %c0_1 = arith.constant 0 : index
    %c0_2 = arith.constant 0 : index
    %9 = vector.load %arg3[%c0_1, %c0_2] : memref<128x256xbf16, #tpu.memory_space<vmem>>, vector<128x256xbf16>
    %cst = arith.constant dense<0.000000e+00> : vector<8x256xf32>
    %10 = tpu.matmul %8, %9, %cst {dimension_numbers = #tpu.dot_dimension_numbers<[1], [0], [0], [1], [0, 0, 1, 1], [], []>} : vector<8x128xbf16>, vector<128x256xbf16>, vector<8x256xf32> -> vector<8x256xf32>
    %c0_3 = arith.constant 0 : index
    %c0_4 = arith.constant 0 : index
    %11 = vector.load %arg4[%c0_3, %c0_4] : memref<6x256xf32, #tpu.memory_space<vmem>>, vector<1x256xf32>
    %12 = vector.broadcast %11 : vector<1x256xf32> to vector<8x256xf32>
    %13 = arith.addf %10, %12 : vector<8x256xf32>
    %c0_i32 = arith.constant 0 : i32
    %14 = arith.cmpi eq, %arg0, %c0_i32 : i32
    %15 = arith.extui %14 : i1 to i32
    %c0_i32_5 = arith.constant 0 : i32
    %16 = arith.cmpi ne, %15, %c0_i32_5 : i32
    scf.if %16 {
      %c0_i32_8 = arith.constant 0 : i32
      %23 = arith.cmpi eq, %arg1, %c0_i32_8 : i32
      %24 = arith.extui %23 : i1 to i32
      %c0_i32_9 = arith.constant 0 : i32
      %25 = arith.cmpi ne, %24, %c0_i32_9 : i32
      scf.if %25 {
        %cst_19 = arith.constant 0.000000e+00 : f32
        %39 = vector.broadcast %cst_19 : f32 to vector<2x256xf32>
        %c0_20 = arith.constant 0 : index
        %c0_21 = arith.constant 0 : index
        %40 = vector.load %arg9[%c0_20, %c0_21] : memref<2x256xf32, #tpu.memory_space<vmem>>, vector<2x256xf32>
        tpu.vector_store %arg9[%c0_20, %c0_21], %39 {strides = array<i32>} : memref<2x256xf32, #tpu.memory_space<vmem>>, vector<2x256xf32>,
      } else {
      }
      %26 = vector.broadcast %7 : vector<8x1xf32> to vector<8x256xf32>
      %27 = arith.mulf %13, %26 : vector<8x256xf32>
      %c0_10 = arith.constant 0 : index
      %c0_11 = arith.constant 0 : index
      %28 = vector.load %arg9[%c0_10, %c0_11] : memref<2x256xf32, #tpu.memory_space<vmem>>, vector<1x256xf32>
      %cst_12 = arith.constant dense<0.000000e+00> : vector<256xf32>
      %29 = vector.multi_reduction <add>, %27, %cst_12 [0] : vector<8x256xf32> to vector<256xf32>
      %30 = vector.shape_cast %29 : vector<256xf32> to vector<1x256xf32>
      %31 = arith.addf %28, %30 : vector<1x256xf32>
      %c0_13 = arith.constant 0 : index
      %c0_14 = arith.constant 0 : index
      %32 = vector.load %arg9[%c0_13, %c0_14] : memref<2x256xf32, #tpu.memory_space<vmem>>, vector<1x256xf32>
      tpu.vector_store %arg9[%c0_13, %c0_14], %31 {strides = array<i32>} : memref<2x256xf32, #tpu.memory_space<vmem>>, vector<1x256xf32>,
      %c1 = arith.constant 1 : index
      %c0_15 = arith.constant 0 : index
      %33 = vector.load %arg9[%c1, %c0_15] : memref<2x256xf32, #tpu.memory_space<vmem>>, vector<1x256xf32>
      %34 = arith.mulf %27, %13 : vector<8x256xf32>
      %cst_16 = arith.constant dense<0.000000e+00> : vector<256xf32>
      %35 = vector.multi_reduction <add>, %34, %cst_16 [0] : vector<8x256xf32> to vector<256xf32>
      %36 = vector.shape_cast %35 : vector<256xf32> to vector<1x256xf32>
      %37 = arith.addf %33, %36 : vector<1x256xf32>
      %c1_17 = arith.constant 1 : index
      %c0_18 = arith.constant 0 : index
      %38 = vector.load %arg9[%c1_17, %c0_18] : memref<2x256xf32, #tpu.memory_space<vmem>>, vector<1x256xf32>
      tpu.vector_store %arg9[%c1_17, %c0_18], %37 {strides = array<i32>} : memref<2x256xf32, #tpu.memory_space<vmem>>, vector<1x256xf32>,
    } else {
    }
    %c1_i32 = arith.constant 1 : i32
    %17 = arith.cmpi eq, %arg0, %c1_i32 : i32
    %18 = arith.extui %17 : i1 to i32
    %c0_i32_6 = arith.constant 0 : i32
    %19 = arith.cmpi ne, %18, %c0_i32_6 : i32
    scf.if %19 {
      %c0_i32_8 = arith.constant 0 : i32
      %23 = arith.cmpi eq, %arg1, %c0_i32_8 : i32
      %24 = arith.extui %23 : i1 to i32
      %c0_i32_9 = arith.constant 0 : i32
      %25 = arith.cmpi ne, %24, %c0_i32_9 : i32
      scf.if %25 {
        %c0_28 = arith.constant 0 : index
        %c0_29 = arith.constant 0 : index
        %53 = vector.load %arg9[%c0_28, %c0_29] : memref<2x256xf32, #tpu.memory_space<vmem>>, vector<1x256xf32>
        %cst_30 = arith.constant 6.250000e-02 : f32
        %54 = vector.broadcast %cst_30 : f32 to vector<1x256xf32>
        %55 = arith.mulf %53, %54 : vector<1x256xf32>
        %c1_31 = arith.constant 1 : index
        %c0_32 = arith.constant 0 : index
        %56 = vector.load %arg9[%c1_31, %c0_32] : memref<2x256xf32, #tpu.memory_space<vmem>>, vector<1x256xf32>
        %cst_33 = arith.constant 6.250000e-02 : f32
        %57 = vector.broadcast %cst_33 : f32 to vector<1x256xf32>
        %58 = arith.mulf %56, %57 : vector<1x256xf32>
        %59 = arith.mulf %55, %55 : vector<1x256xf32>
        %60 = arith.subf %58, %59 : vector<1x256xf32>
        %c1_34 = arith.constant 1 : index
        %c0_35 = arith.constant 0 : index
        %61 = vector.load %arg4[%c1_34, %c0_35] : memref<6x256xf32, #tpu.memory_space<vmem>>, vector<1x256xf32>
        %cst_36 = arith.constant 9.99999974E-6 : f32
        %62 = vector.broadcast %cst_36 : f32 to vector<1x256xf32>
        %63 = arith.addf %60, %62 : vector<1x256xf32>
        %64 = math.rsqrt %63 : vector<1x256xf32>
        %65 = arith.mulf %61, %64 : vector<1x256xf32>
        %c0_37 = arith.constant 0 : index
        %c0_38 = arith.constant 0 : index
        %66 = vector.load %arg11[%c0_37, %c0_38] : memref<2x256xf32, #tpu.memory_space<vmem>>, vector<1x256xf32>
        tpu.vector_store %arg11[%c0_37, %c0_38], %65 {strides = array<i32>} : memref<2x256xf32, #tpu.memory_space<vmem>>, vector<1x256xf32>,
        %c2 = arith.constant 2 : index
        %c0_39 = arith.constant 0 : index
        %67 = vector.load %arg4[%c2, %c0_39] : memref<6x256xf32, #tpu.memory_space<vmem>>, vector<1x256xf32>
        %68 = arith.mulf %55, %65 : vector<1x256xf32>
        %69 = arith.subf %67, %68 : vector<1x256xf32>
        %c1_40 = arith.constant 1 : index
        %c0_41 = arith.constant 0 : index
        %70 = vector.load %arg11[%c1_40, %c0_41] : memref<2x256xf32, #tpu.memory_space<vmem>>, vector<1x256xf32>
        tpu.vector_store %arg11[%c1_40, %c0_41], %69 {strides = array<i32>} : memref<2x256xf32, #tpu.memory_space<vmem>>, vector<1x256xf32>,
        %cst_42 = arith.constant 0.000000e+00 : f32
        %71 = vector.broadcast %cst_42 : f32 to vector<2x256xf32>
        %c0_43 = arith.constant 0 : index
        %c0_44 = arith.constant 0 : index
        %72 = vector.load %arg10[%c0_43, %c0_44] : memref<2x256xf32, #tpu.memory_space<vmem>>, vector<2x256xf32>
        tpu.vector_store %arg10[%c0_43, %c0_44], %71 {strides = array<i32>} : memref<2x256xf32, #tpu.memory_space<vmem>>, vector<2x256xf32>,
      } else {
      }
      %c0_10 = arith.constant 0 : index
      %c0_11 = arith.constant 0 : index
      %26 = vector.load %arg11[%c0_10, %c0_11] : memref<2x256xf32, #tpu.memory_space<vmem>>, vector<1x256xf32>
      %27 = vector.broadcast %26 : vector<1x256xf32> to vector<8x256xf32>
      %28 = arith.mulf %13, %27 : vector<8x256xf32>
      %c1 = arith.constant 1 : index
      %c0_12 = arith.constant 0 : index
      %29 = vector.load %arg11[%c1, %c0_12] : memref<2x256xf32, #tpu.memory_space<vmem>>, vector<1x256xf32>
      %30 = vector.broadcast %29 : vector<1x256xf32> to vector<8x256xf32>
      %31 = arith.addf %28, %30 : vector<8x256xf32>
      %cst_13 = arith.constant 0.000000e+00 : f32
      %32 = vector.broadcast %cst_13 : f32 to vector<8x256xf32>
      %33 = arith.maximumf %31, %32 : vector<8x256xf32>
      %34 = arith.truncf %33 : vector<8x256xf32> to vector<8x256xbf16>
      %c0_14 = arith.constant 0 : index
      %c0_15 = arith.constant 0 : index
      %35 = vector.load %arg5[%c0_14, %c0_15] : memref<256x256xbf16, #tpu.memory_space<vmem>>, vector<256x256xbf16>
      %cst_16 = arith.constant dense<0.000000e+00> : vector<8x256xf32>
      %36 = tpu.matmul %34, %35, %cst_16 {dimension_numbers = #tpu.dot_dimension_numbers<[1], [0], [0], [1], [0, 0, 1, 1], [], []>} : vector<8x256xbf16>, vector<256x256xbf16>, vector<8x256xf32> -> vector<8x256xf32>
      %c3 = arith.constant 3 : index
      %c0_17 = arith.constant 0 : index
      %37 = vector.load %arg4[%c3, %c0_17] : memref<6x256xf32, #tpu.memory_space<vmem>>, vector<1x256xf32>
      %38 = vector.broadcast %37 : vector<1x256xf32> to vector<8x256xf32>
      %39 = arith.addf %36, %38 : vector<8x256xf32>
      %40 = vector.broadcast %7 : vector<8x1xf32> to vector<8x256xf32>
      %41 = arith.mulf %39, %40 : vector<8x256xf32>
      %c0_18 = arith.constant 0 : index
      %c0_19 = arith.constant 0 : index
      %42 = vector.load %arg10[%c0_18, %c0_19] : memref<2x256xf32, #tpu.memory_space<vmem>>, vector<1x256xf32>
      %cst_20 = arith.constant dense<0.000000e+00> : vector<256xf32>
      %43 = vector.multi_reduction <add>, %41, %cst_20 [0] : vector<8x256xf32> to vector<256xf32>
      %44 = vector.shape_cast %43 : vector<256xf32> to vector<1x256xf32>
      %45 = arith.addf %42, %44 : vector<1x256xf32>
      %c0_21 = arith.constant 0 : index
      %c0_22 = arith.constant 0 : index
      %46 = vector.load %arg10[%c0_21, %c0_22] : memref<2x256xf32, #tpu.memory_space<vmem>>, vector<1x256xf32>
      tpu.vector_store %arg10[%c0_21, %c0_22], %45 {strides = array<i32>} : memref<2x256xf32, #tpu.memory_space<vmem>>, vector<1x256xf32>,
      %c1_23 = arith.constant 1 : index
      %c0_24 = arith.constant 0 : index
      %47 = vector.load %arg10[%c1_23, %c0_24] : memref<2x256xf32, #tpu.memory_space<vmem>>, vector<1x256xf32>
      %48 = arith.mulf %41, %39 : vector<8x256xf32>
      %cst_25 = arith.constant dense<0.000000e+00> : vector<256xf32>
      %49 = vector.multi_reduction <add>, %48, %cst_25 [0] : vector<8x256xf32> to vector<256xf32>
      %50 = vector.shape_cast %49 : vector<256xf32> to vector<1x256xf32>
      %51 = arith.addf %47, %50 : vector<1x256xf32>
      %c1_26 = arith.constant 1 : index
      %c0_27 = arith.constant 0 : index
      %52 = vector.load %arg10[%c1_26, %c0_27] : memref<2x256xf32, #tpu.memory_space<vmem>>, vector<1x256xf32>
      tpu.vector_store %arg10[%c1_26, %c0_27], %51 {strides = array<i32>} : memref<2x256xf32, #tpu.memory_space<vmem>>, vector<1x256xf32>,
    } else {
    }
    %c2_i32 = arith.constant 2 : i32
    %20 = arith.cmpi eq, %arg0, %c2_i32 : i32
    %21 = arith.extui %20 : i1 to i32
    %c0_i32_7 = arith.constant 0 : i32
    %22 = arith.cmpi ne, %21, %c0_i32_7 : i32
    scf.if %22 {
      %c0_i32_8 = arith.constant 0 : i32
      %23 = arith.cmpi eq, %arg1, %c0_i32_8 : i32
      %24 = arith.extui %23 : i1 to i32
      %c0_i32_9 = arith.constant 0 : i32
      %25 = arith.cmpi ne, %24, %c0_i32_9 : i32
      scf.if %25 {
        %c0_31 = arith.constant 0 : index
        %c0_32 = arith.constant 0 : index
        %57 = vector.load %arg10[%c0_31, %c0_32] : memref<2x256xf32, #tpu.memory_space<vmem>>, vector<1x256xf32>
        %cst_33 = arith.constant 6.250000e-02 : f32
        %58 = vector.broadcast %cst_33 : f32 to vector<1x256xf32>
        %59 = arith.mulf %57, %58 : vector<1x256xf32>
        %c1_34 = arith.constant 1 : index
        %c0_35 = arith.constant 0 : index
        %60 = vector.load %arg10[%c1_34, %c0_35] : memref<2x256xf32, #tpu.memory_space<vmem>>, vector<1x256xf32>
        %cst_36 = arith.constant 6.250000e-02 : f32
        %61 = vector.broadcast %cst_36 : f32 to vector<1x256xf32>
        %62 = arith.mulf %60, %61 : vector<1x256xf32>
        %63 = arith.mulf %59, %59 : vector<1x256xf32>
        %64 = arith.subf %62, %63 : vector<1x256xf32>
        %c4 = arith.constant 4 : index
        %c0_37 = arith.constant 0 : index
        %65 = vector.load %arg4[%c4, %c0_37] : memref<6x256xf32, #tpu.memory_space<vmem>>, vector<1x256xf32>
        %cst_38 = arith.constant 9.99999974E-6 : f32
        %66 = vector.broadcast %cst_38 : f32 to vector<1x256xf32>
        %67 = arith.addf %64, %66 : vector<1x256xf32>
        %68 = math.rsqrt %67 : vector<1x256xf32>
        %69 = arith.mulf %65, %68 : vector<1x256xf32>
        %c0_39 = arith.constant 0 : index
        %c0_40 = arith.constant 0 : index
        %70 = vector.load %arg12[%c0_39, %c0_40] : memref<2x256xf32, #tpu.memory_space<vmem>>, vector<1x256xf32>
        tpu.vector_store %arg12[%c0_39, %c0_40], %69 {strides = array<i32>} : memref<2x256xf32, #tpu.memory_space<vmem>>, vector<1x256xf32>,
        %c5 = arith.constant 5 : index
        %c0_41 = arith.constant 0 : index
        %71 = vector.load %arg4[%c5, %c0_41] : memref<6x256xf32, #tpu.memory_space<vmem>>, vector<1x256xf32>
        %72 = arith.mulf %59, %69 : vector<1x256xf32>
        %73 = arith.subf %71, %72 : vector<1x256xf32>
        %c1_42 = arith.constant 1 : index
        %c0_43 = arith.constant 0 : index
        %74 = vector.load %arg12[%c1_42, %c0_43] : memref<2x256xf32, #tpu.memory_space<vmem>>, vector<1x256xf32>
        tpu.vector_store %arg12[%c1_42, %c0_43], %73 {strides = array<i32>} : memref<2x256xf32, #tpu.memory_space<vmem>>, vector<1x256xf32>,
      } else {
      }
      %c0_10 = arith.constant 0 : index
      %c0_11 = arith.constant 0 : index
      %26 = vector.load %arg11[%c0_10, %c0_11] : memref<2x256xf32, #tpu.memory_space<vmem>>, vector<1x256xf32>
      %27 = vector.broadcast %26 : vector<1x256xf32> to vector<8x256xf32>
      %28 = arith.mulf %13, %27 : vector<8x256xf32>
      %c1 = arith.constant 1 : index
      %c0_12 = arith.constant 0 : index
      %29 = vector.load %arg11[%c1, %c0_12] : memref<2x256xf32, #tpu.memory_space<vmem>>, vector<1x256xf32>
      %30 = vector.broadcast %29 : vector<1x256xf32> to vector<8x256xf32>
      %31 = arith.addf %28, %30 : vector<8x256xf32>
      %cst_13 = arith.constant 0.000000e+00 : f32
      %32 = vector.broadcast %cst_13 : f32 to vector<8x256xf32>
      %33 = arith.maximumf %31, %32 : vector<8x256xf32>
      %34 = arith.truncf %33 : vector<8x256xf32> to vector<8x256xbf16>
      %c0_14 = arith.constant 0 : index
      %c0_15 = arith.constant 0 : index
      %35 = vector.load %arg5[%c0_14, %c0_15] : memref<256x256xbf16, #tpu.memory_space<vmem>>, vector<256x256xbf16>
      %cst_16 = arith.constant dense<0.000000e+00> : vector<8x256xf32>
      %36 = tpu.matmul %34, %35, %cst_16 {dimension_numbers = #tpu.dot_dimension_numbers<[1], [0], [0], [1], [0, 0, 1, 1], [], []>} : vector<8x256xbf16>, vector<256x256xbf16>, vector<8x256xf32> -> vector<8x256xf32>
      %c3 = arith.constant 3 : index
      %c0_17 = arith.constant 0 : index
      %37 = vector.load %arg4[%c3, %c0_17] : memref<6x256xf32, #tpu.memory_space<vmem>>, vector<1x256xf32>
      %38 = vector.broadcast %37 : vector<1x256xf32> to vector<8x256xf32>
      %39 = arith.addf %36, %38 : vector<8x256xf32>
      %c0_18 = arith.constant 0 : index
      %c0_19 = arith.constant 0 : index
      %40 = vector.load %arg12[%c0_18, %c0_19] : memref<2x256xf32, #tpu.memory_space<vmem>>, vector<1x256xf32>
      %41 = vector.broadcast %40 : vector<1x256xf32> to vector<8x256xf32>
      %42 = arith.mulf %39, %41 : vector<8x256xf32>
      %c1_20 = arith.constant 1 : index
      %c0_21 = arith.constant 0 : index
      %43 = vector.load %arg12[%c1_20, %c0_21] : memref<2x256xf32, #tpu.memory_space<vmem>>, vector<1x256xf32>
      %44 = vector.broadcast %43 : vector<1x256xf32> to vector<8x256xf32>
      %45 = arith.addf %42, %44 : vector<8x256xf32>
      %cst_22 = arith.constant 0.000000e+00 : f32
      %46 = vector.broadcast %cst_22 : f32 to vector<8x256xf32>
      %47 = arith.maximumf %45, %46 : vector<8x256xf32>
      %48 = arith.truncf %47 : vector<8x256xf32> to vector<8x256xbf16>
      %c0_23 = arith.constant 0 : index
      %c0_24 = arith.constant 0 : index
      %49 = vector.load %arg6[%c0_23, %c0_24] : memref<256x128xbf16, #tpu.memory_space<vmem>>, vector<256x128xbf16>
      %cst_25 = arith.constant dense<0.000000e+00> : vector<8x128xf32>
      %50 = tpu.matmul %48, %49, %cst_25 {dimension_numbers = #tpu.dot_dimension_numbers<[1], [0], [0], [1], [0, 0, 1, 1], [], []>} : vector<8x256xbf16>, vector<256x128xbf16>, vector<8x128xf32> -> vector<8x128xf32>
      %c0_26 = arith.constant 0 : index
      %c0_27 = arith.constant 0 : index
      %51 = vector.load %arg7[%c0_26, %c0_27] : memref<1x128xf32, #tpu.memory_space<vmem>>, vector<1x128xf32>
      %52 = vector.broadcast %51 : vector<1x128xf32> to vector<8x128xf32>
      %53 = arith.addf %50, %52 : vector<8x128xf32>
      %cst_28 = arith.constant 0.000000e+00 : f32
      %54 = vector.broadcast %cst_28 : f32 to vector<8x128xf32>
      %55 = arith.maximumf %53, %54 : vector<8x128xf32>
      %c0_29 = arith.constant 0 : index
      %c0_30 = arith.constant 0 : index
      %56 = vector.load %arg8[%c0_29, %c0_30] : memref<8x128xf32, #tpu.memory_space<vmem>>, vector<8x128xf32>
      tpu.vector_store %arg8[%c0_29, %c0_30], %55 {strides = array<i32>} : memref<8x128xf32, #tpu.memory_space<vmem>>, vector<8x128xf32>,
    } else {
    }
    return
  }
  func.func @transform_0(%arg0: i32, %arg1: i32) -> (i32, i32) {
    %c0_i32 = arith.constant 0 : i32
    %c0_i32_0 = arith.constant 0 : i32
    return %arg1, %c0_i32 : i32, i32
  }
  func.func @transform_1(%arg0: i32, %arg1: i32) -> (i32, i32) {
    %c0_i32 = arith.constant 0 : i32
    %c0_i32_0 = arith.constant 0 : i32
    %c0_i32_1 = arith.constant 0 : i32
    return %c0_i32, %c0_i32_0 : i32, i32
  }
  func.func @transform_2(%arg0: i32, %arg1: i32) -> (i32, i32) {
    %c0_i32 = arith.constant 0 : i32
    %c0_i32_0 = arith.constant 0 : i32
    %c0_i32_1 = arith.constant 0 : i32
    return %c0_i32, %c0_i32_0 : i32, i32
  }
  func.func @transform_3(%arg0: i32, %arg1: i32) -> (i32, i32) {
    %c0_i32 = arith.constant 0 : i32
    %c0_i32_0 = arith.constant 0 : i32
    %c0_i32_1 = arith.constant 0 : i32
    return %c0_i32, %c0_i32_0 : i32, i32
  }
  func.func @transform_4(%arg0: i32, %arg1: i32) -> (i32, i32) {
    %c0_i32 = arith.constant 0 : i32
    %c0_i32_0 = arith.constant 0 : i32
    %c0_i32_1 = arith.constant 0 : i32
    return %c0_i32, %c0_i32_0 : i32, i32
  }
  func.func @transform_5(%arg0: i32, %arg1: i32) -> (i32, i32) {
    %c0_i32 = arith.constant 0 : i32
    %c0_i32_0 = arith.constant 0 : i32
    %c0_i32_1 = arith.constant 0 : i32
    return %c0_i32, %c0_i32_0 : i32, i32
  }
  func.func @transform_6(%arg0: i32, %arg1: i32) -> (i32, i32) {
    %c2_i32 = arith.constant 2 : i32
    %0 = arith.cmpi eq, %arg0, %c2_i32 : i32
    %c0_i32 = arith.constant 0 : i32
    %1 = arith.select %0, %arg1, %c0_i32 : i32
    %c0_i32_0 = arith.constant 0 : i32
    %c0_i32_1 = arith.constant 0 : i32
    return %1, %c0_i32_0 : i32, i32
  }
}

</mosaic_0001>

<llo_original>
// kernel: dense_autoencoder_forward.1
$region0: #{dense_autoencoder_forward.1}
  #allocation0 [shape = 'u32[]', space=smem, size = 0x4, offset = 0x4, fixed_abs, tag = 'smem constant byte address 0x4 - core index']
  #allocation1 [shape = 'u32[72,128]{1,0:T(1,128)}', space=vmem, size = 0x9000, scoped, tag = 'internal scratch']
  #allocation2 [shape = 'f32[2,256]{1,0:T(2,128)}', space=vmem, size = 0x800, scoped, tag = 'scratch operand']
  #allocation3 [shape = 'f32[2,256]{1,0:T(2,128)}', space=vmem, size = 0x800, scoped, tag = 'scratch operand']
  #allocation4 [shape = 'f32[2,256]{1,0:T(2,128)}', space=vmem, size = 0x800, scoped, tag = 'scratch operand']
  #allocation5 [shape = 'f32[2,256]{1,0:T(2,128)}', space=vmem, size = 0x800, scoped, tag = 'scratch operand']
  %s0 = inlined_call_operand.vmem [shape: bf16[16,128], index: 0, kind: input, shape index: {}]
  %s1 = inlined_call_operand.hbm [shape: bf16[128,256], index: 1, kind: input, shape index: {}]
  %s2 = inlined_call_operand.vmem [shape: f32[6,256], index: 2, kind: input, shape index: {}]
  %s3 = inlined_call_operand.hbm [shape: bf16[256,256], index: 3, kind: input, shape index: {}]
  %s4 = inlined_call_operand.hbm [shape: bf16[256,128], index: 4, kind: input, shape index: {}]
  %s5 = inlined_call_operand.vmem [shape: f32[1,128], index: 5, kind: input, shape index: {}]
  %s6 = inlined_call_operand.hbm [shape: f32[16,128], index: 6, kind: output, shape index: {}]
  %s7 = sld [smem:[#allocation0]]
  $region93: #{dense_autoencoder_forward.1} parent=0
    _
  %s9 = ssub.s32 1, %s7
  %s10 = scalar_select 0, %s9, %s7
  $region1: #{dense_autoencoder_forward.1} parent=0
    #allocation6 [shape = 'u8[65536]{0}', space=vmem, size = 0x10000, scoped, tag = 'input window, operand 1, single buffered']
    #allocation7 [shape = 's32[2]{0}', space=sflag, size = 0x8, scoped, tag = 'scoped memory for dense_autoencoder_forward.1']
    #allocation8 [shape = 's32[2]{0}', space=sflag, size = 0x8, scoped, tag = 'scoped memory for dense_autoencoder_forward.1']
    #allocation9 [shape = 'u8[131072]{0}', space=vmem, size = 0x20000, scoped, tag = 'input window, operand 3, single buffered']
    #allocation10 [shape = 's32[1]{0}', space=sflag, size = 0x4, scoped, tag = 'scoped memory for dense_autoencoder_forward.1']
    #allocation11 [shape = 'u8[65536]{0}', space=vmem, size = 0x10000, scoped, tag = 'input window, operand 4, single buffered']
    #allocation12 [shape = 'u8[8192]{0}', space=vmem, size = 0x2000, scoped, tag = 'output window, operand 0']
    %11 = vsyncpa [#allocation7], 0
    %12 = vsyncpa [#allocation10], 0
    %13 = vsyncpa [#allocation8], 0
    %s14 = scalar_lea.sflag [#allocation8], 1
    %15 = vsyncpa %s14, 0
    loop: start=0, step=1, limit=8
    $region2: #{dense_autoencoder_forward.1} parent=1 // loop_pre_header
      _
    $region3: #{dense_autoencoder_forward.1} parent=1 // loop_header
      %s17 = sphi 0, %s21
      %p18 = scmp.ge.s32.totalorder %s17, 8
      %s24 = sphi 0, %s36
      %s25 = sphi 0, %s32
      %s26 = sphi 0, %s24
      %s27 = sphi 0, %s25
      %s28 = sphi 0, %s26
      %s29 = sphi 0, %s27
      %s39 = sphi 0, %s41
      %s42 = sphi 0, %s39
      %s43 = sphi 0, %s42
      %s59 = sphi 0, %s43
      %s63 = sphi 0, %s63
      %s65 = sphi 0, %s63
      %s66 = sphi 0, %s65
      %s80 = sphi 0, %s66
      %s84 = sphi 0, %s84
      %s86 = sphi 0, %s84
      %s87 = sphi 0, %s86
      %s101 = sphi 0, %s87
      %s105 = sphi 0, %s105
      %s107 = sphi 0, %s105
      %s108 = sphi 0, %s107
      %s122 = sphi 0, %s108
      %s126 = sphi 0, %s126
      %s128 = sphi 0, %s126
      %s129 = sphi 0, %s128
      %s143 = sphi 0, %s129
      %s147 = sphi 0, %s147
      %s149 = sphi 0, %s147
      %s150 = sphi 0, %s149
      %s164 = sphi 0, %s150
      %s174 = sphi 0, %s176
      %s177 = sphi 0, %s174
      %s178 = sphi 0, %s177
      %s194 = sphi 0, %s178
    $region4: #{dense_autoencoder_forward.1} parent=1 // loop_header_branch
      %20 = sbr.rel (%p18) target = $region8
    $region5: #{dense_autoencoder_forward.1} parent=1 // loop_body
      %s22 = ssub.s32 %s17, 1
      %s23 = ssub.s32 %s17, 2
      %s30 = sadd.s32 1, %s25
      %p31 = scmp.ge.s32.totalorder %s30, 2
      %s32 = scalar_select %p31, 0, %s30
      %s33 = sadd.s32 1, %s24
      %s34 = scalar_select %p31, %s33, %s24
      %p35 = scmp.ge.s32.totalorder %s34, 3
      %s36 = scalar_select %p35, 0, %s34
      %s37 = ssub.s32 %s25, %s32
      %p38 = scmp.eq.s32.totalorder %s37, 0
      %s40 = sadd.s32 %s39, 1
      %s41 = scalar_select %p38, %s39, %s40
      %p44 = pneg %p38
      %p45 = scmp.eq.s32.totalorder %s17, 5
      %p46 = por %p44, %p45
      %p47 = scmp.ne.s32.totalorder %s39, %s42
      %p48 = scmp.eq.s32.totalorder %s17, 0
      %p49 = por %p47, %p48
      %p50 = scmp.ne.s32.totalorder %s39, %s42
      %p51 = scmp.eq.s32.totalorder %s22, 5
      %p52 = por %p50, %p51
      %p53 = scmp.ne.s32.totalorder %s42, %s43
      %p54 = scmp.eq.s32.totalorder %s22, 0
      %p55 = por %p53, %p54
      %p56 = scmp.ne.s32.totalorder %s42, %s43
      %p57 = scmp.eq.s32.totalorder %s23, 5
      %p58 = por %p56, %p57
      %p60 = scmp.ne.s32.totalorder %s43, %s59
      %p61 = scmp.eq.s32.totalorder %s23, 0
      %p62 = por %p60, %p61
      %s64 = sadd.s32 %s63, 1
      %p67 = scmp.eq.s32.totalorder %s17, 5
      %p68 = scmp.ne.s32.totalorder %s63, %s65
      %p69 = scmp.eq.s32.totalorder %s17, 0
      %p70 = por %p68, %p69
      %p71 = scmp.ne.s32.totalorder %s63, %s65
      %p72 = scmp.eq.s32.totalorder %s22, 5
      %p73 = por %p71, %p72
      %p74 = scmp.ne.s32.totalorder %s65, %s66
      %p75 = scmp.eq.s32.totalorder %s22, 0
      %p76 = por %p74, %p75
      %p77 = scmp.ne.s32.totalorder %s65, %s66
      %p78 = scmp.eq.s32.totalorder %s23, 5
      %p79 = por %p77, %p78
      %p81 = scmp.ne.s32.totalorder %s66, %s80
      %p82 = scmp.eq.s32.totalorder %s23, 0
      %p83 = por %p81, %p82
      %s85 = sadd.s32 %s84, 1
      %p88 = scmp.eq.s32.totalorder %s17, 5
      %p89 = scmp.ne.s32.totalorder %s84, %s86
      %p90 = scmp.eq.s32.totalorder %s17, 0
      %p91 = por %p89, %p90
      %p92 = scmp.ne.s32.totalorder %s84, %s86
      %p93 = scmp.eq.s32.totalorder %s22, 5
      %p94 = por %p92, %p93
      %p95 = scmp.ne.s32.totalorder %s86, %s87
      %p96 = scmp.eq.s32.totalorder %s22, 0
      %p97 = por %p95, %p96
      %p98 = scmp.ne.s32.totalorder %s86, %s87
      %p99 = scmp.eq.s32.totalorder %s23, 5
      %p100 = por %p98, %p99
      %p102 = scmp.ne.s32.totalorder %s87, %s101
      %p103 = scmp.eq.s32.totalorder %s23, 0
      %p104 = por %p102, %p103
      %s106 = sadd.s32 %s105, 1
      %p109 = scmp.eq.s32.totalorder %s17, 5
      %p110 = scmp.ne.s32.totalorder %s105, %s107
      %p111 = scmp.eq.s32.totalorder %s17, 0
      %p112 = por %p110, %p111
      %p113 = scmp.ne.s32.totalorder %s105, %s107
      %p114 = scmp.eq.s32.totalorder %s22, 5
      %p115 = por %p113, %p114
      %p116 = scmp.ne.s32.totalorder %s107, %s108
      %p117 = scmp.eq.s32.totalorder %s22, 0
      %p118 = por %p116, %p117
      %p119 = scmp.ne.s32.totalorder %s107, %s108
      %p120 = scmp.eq.s32.totalorder %s23, 5
      %p121 = por %p119, %p120
      %p123 = scmp.ne.s32.totalorder %s108, %s122
      %p124 = scmp.eq.s32.totalorder %s23, 0
      %p125 = por %p123, %p124
      %s127 = sadd.s32 %s126, 1
      %p130 = scmp.eq.s32.totalorder %s17, 5
      %p131 = scmp.ne.s32.totalorder %s126, %s128
      %p132 = scmp.eq.s32.totalorder %s17, 0
      %p133 = por %p131, %p132
      %p134 = scmp.ne.s32.totalorder %s126, %s128
      %p135 = scmp.eq.s32.totalorder %s22, 5
      %p136 = por %p134, %p135
      %p137 = scmp.ne.s32.totalorder %s128, %s129
      %p138 = scmp.eq.s32.totalorder %s22, 0
      %p139 = por %p137, %p138
      %p140 = scmp.ne.s32.totalorder %s128, %s129
      %p141 = scmp.eq.s32.totalorder %s23, 5
      %p142 = por %p140, %p141
      %p144 = scmp.ne.s32.totalorder %s129, %s143
      %p145 = scmp.eq.s32.totalorder %s23, 0
      %p146 = por %p144, %p145
      %s148 = sadd.s32 %s147, 1
      %p151 = scmp.eq.s32.totalorder %s17, 5
      %p152 = scmp.ne.s32.totalorder %s147, %s149
      %p153 = scmp.eq.s32.totalorder %s17, 0
      %p154 = por %p152, %p153
      %p155 = scmp.ne.s32.totalorder %s147, %s149
      %p156 = scmp.eq.s32.totalorder %s22, 5
      %p157 = por %p155, %p156
      %p158 = scmp.ne.s32.totalorder %s149, %s150
      %p159 = scmp.eq.s32.totalorder %s22, 0
      %p160 = por %p158, %p159
      %p161 = scmp.ne.s32.totalorder %s149, %s150
      %p162 = scmp.eq.s32.totalorder %s23, 5
      %p163 = por %p161, %p162
      %p165 = scmp.ne.s32.totalorder %s150, %s164
      %p166 = scmp.eq.s32.totalorder %s23, 0
      %p167 = por %p165, %p166
      %p168 = scmp.eq.s32.totalorder %s24, 2
      %s169 = scalar_select %p168, %s25, 0
      %p170 = scmp.eq.s32.totalorder %s36, 2
      %s171 = scalar_select %p170, %s32, 0
      %s172 = ssub.s32 %s169, %s171
      %p173 = scmp.eq.s32.totalorder %s172, 0
      %s175 = sadd.s32 %s174, 1
      %s176 = scalar_select %p173, %s174, %s175
      %p179 = pneg %p173
      %p180 = scmp.eq.s32.totalorder %s17, 5
      %p181 = por %p179, %p180
      %p182 = scmp.ne.s32.totalorder %s174, %s177
      %p183 = scmp.eq.s32.totalorder %s17, 0
      %p184 = por %p182, %p183
      %p185 = scmp.ne.s32.totalorder %s174, %s177
      %p186 = scmp.eq.s32.totalorder %s22, 5
      %p187 = por %p185, %p186
      %p188 = scmp.ne.s32.totalorder %s177, %s178
      %p189 = scmp.eq.s32.totalorder %s22, 0
      %p190 = por %p188, %p189
      %p191 = scmp.ne.s32.totalorder %s177, %s178
      %p192 = scmp.eq.s32.totalorder %s23, 5
      %p193 = por %p191, %p192
      %p195 = scmp.ne.s32.totalorder %s178, %s194
      %p196 = scmp.eq.s32.totalorder %s23, 0
      %p197 = por %p195, %p196
      %p198 = scmp.le.s32.totalorder 1, %s17
      %p199 = scmp.lt.s32.totalorder %s17, 7
      %p200 = pnand %p198, %p199
      %p201 = pneg %p200
      // Predicated region
      $region9: #{dense_autoencoder_forward.1} parent=5 // pred_check
        _
      $region10: #{dense_autoencoder_forward.1} parent=5 // pred_check_branch
        %203 = sbr.rel (%p200) target = $region12
      $region11: #{dense_autoencoder_forward.1} parent=5 // pred_region
        %s204 = ssub.s32 %s17, 1
        // Predicated region
        $region13: #{dense_autoencoder_forward.1} parent=11 // pred_check
          %p205 = pneg %p76
        $region14: #{dense_autoencoder_forward.1} parent=11 // pred_check_branch
          %207 = sbr.rel (%p205) target = $region16
        $region15: #{dense_autoencoder_forward.1} parent=11 // pred_region
          %209 = vsyncadd [#allocation7], 0
          %s210 = sshll.u32 %s1, 4
          %s211 = int_to_ptr.hbm [resolvable:$true] %s210
          %s212 = sshll.u32 [#allocation6], 4
          %s213 = int_to_ptr.vmem [resolvable:$true] %s212
          %218 = dma.hbm_to_vmem [thread:$0]  %s211, 2048, %s213, [#allocation7], 128, 128, 8
        $region16: #{dense_autoencoder_forward.1} parent=11 // pred_fallthru
          _
        // Predicated region
        $region17: #{dense_autoencoder_forward.1} parent=11 // pred_check
          %p219 = pneg %p97
        $region18: #{dense_autoencoder_forward.1} parent=11 // pred_check_branch
          %221 = sbr.rel (%p219) target = $region20
        $region19: #{dense_autoencoder_forward.1} parent=11 // pred_region
          _
        $region20: #{dense_autoencoder_forward.1} parent=11 // pred_fallthru
          _
        // Predicated region
        $region21: #{dense_autoencoder_forward.1} parent=11 // pred_check
          %p222 = pneg %p118
        $region22: #{dense_autoencoder_forward.1} parent=11 // pred_check_branch
          %224 = sbr.rel (%p222) target = $region24
        $region23: #{dense_autoencoder_forward.1} parent=11 // pred_region
          %226 = vsyncadd [#allocation10], 0
          %s227 = sshll.u32 %s3, 4
          %s228 = int_to_ptr.hbm [resolvable:$true] %s227
          %s229 = sshll.u32 [#allocation9], 4
          %s230 = int_to_ptr.vmem [resolvable:$true] %s229
          %235 = dma.hbm_to_vmem [thread:$0]  %s228, 4096, %s230, [#allocation10], 128, 128, 8
        $region24: #{dense_autoencoder_forward.1} parent=11 // pred_fallthru
          _
        // Predicated region
        $region25: #{dense_autoencoder_forward.1} parent=11 // pred_check
          %p236 = pneg %p139
        $region26: #{dense_autoencoder_forward.1} parent=11 // pred_check_branch
          %238 = sbr.rel (%p236) target = $region28
        $region27: #{dense_autoencoder_forward.1} parent=11 // pred_region
          %240 = vsyncadd [#allocation10], 0
          %s241 = sshll.u32 %s4, 4
          %s242 = int_to_ptr.hbm [resolvable:$true] %s241
          %s243 = sshll.u32 [#allocation11], 4
          %s244 = int_to_ptr.vmem [resolvable:$true] %s243
          %249 = dma.hbm_to_vmem [thread:$0]  %s242, 2048, %s244, [#allocation10], 64, 64, 4
        $region28: #{dense_autoencoder_forward.1} parent=11 // pred_fallthru
          _
        // Predicated region
        $region29: #{dense_autoencoder_forward.1} parent=11 // pred_check
          %p250 = pneg %p160
        $region30: #{dense_autoencoder_forward.1} parent=11 // pred_check_branch
          %252 = sbr.rel (%p250) target = $region32
        $region31: #{dense_autoencoder_forward.1} parent=11 // pred_region
          _
        $region32: #{dense_autoencoder_forward.1} parent=11 // pred_fallthru
          _
      $region12: #{dense_autoencoder_forward.1} parent=5 // pred_fallthru
        _
      %p253 = scmp.lt.s32.totalorder %s17, 6
      // Predicated region
      $region33: #{dense_autoencoder_forward.1} parent=5 // pred_check
        %p254 = pneg %p253
      $region34: #{dense_autoencoder_forward.1} parent=5 // pred_check_branch
        %256 = sbr.rel (%p254) target = $region36
      $region35: #{dense_autoencoder_forward.1} parent=5 // pred_region
        // Predicated region
        $region37: #{dense_autoencoder_forward.1} parent=35 // pred_check
          %p257 = pneg %p49
        $region38: #{dense_autoencoder_forward.1} parent=35 // pred_check_branch
          %259 = sbr.rel (%p257) target = $region40
        $region39: #{dense_autoencoder_forward.1} parent=35 // pred_region
          %p260 = scmp.lt.s32.totalorder %s25, 1
          %s261 = scalar_select %p260, %s25, 1
          %s262 = smul.addr %s261, 4
          %s263 = scalar_lea.vmem %s0, %s262
        $region40: #{dense_autoencoder_forward.1} parent=35 // pred_fallthru
          _
      $region36: #{dense_autoencoder_forward.1} parent=5 // pred_fallthru
        _
      %p264 = scmp.le.s32.totalorder 1, %s17
      %p265 = scmp.lt.s32.totalorder %s17, 7
      %p266 = pnand %p264, %p265
      %p267 = pneg %p266
      // Predicated region
      $region41: #{dense_autoencoder_forward.1} parent=5 // pred_check
        _
      $region42: #{dense_autoencoder_forward.1} parent=5 // pred_check_branch
        %269 = sbr.rel (%p266) target = $region44
      $region43: #{dense_autoencoder_forward.1} parent=5 // pred_region
        %s270 = ssub.s32 %s17, 1
        // Predicated region
        $region45: #{dense_autoencoder_forward.1} parent=43 // pred_check
          %p271 = pneg %p76
        $region46: #{dense_autoencoder_forward.1} parent=43 // pred_check_branch
          %273 = sbr.rel (%p271) target = $region48
        $region47: #{dense_autoencoder_forward.1} parent=43 // pred_region
          %275 = dma.done [#allocation7], 2048
        $region48: #{dense_autoencoder_forward.1} parent=43 // pred_fallthru
          _
        // Predicated region
        $region49: #{dense_autoencoder_forward.1} parent=43 // pred_check
          %p276 = pneg %p118
        $region50: #{dense_autoencoder_forward.1} parent=43 // pred_check_branch
          %278 = sbr.rel (%p276) target = $region52
        $region51: #{dense_autoencoder_forward.1} parent=43 // pred_region
          %280 = dma.done [#allocation10], 4096
        $region52: #{dense_autoencoder_forward.1} parent=43 // pred_fallthru
          _
        // Predicated region
        $region53: #{dense_autoencoder_forward.1} parent=43 // pred_check
          %p281 = pneg %p139
        $region54: #{dense_autoencoder_forward.1} parent=43 // pred_check_branch
          %283 = sbr.rel (%p281) target = $region56
        $region55: #{dense_autoencoder_forward.1} parent=43 // pred_region
          %285 = dma.done [#allocation10], 2048
        $region56: #{dense_autoencoder_forward.1} parent=43 // pred_fallthru
          _
        %p286 = scmp.lt.s32.totalorder %s27, 1
        %s287 = scalar_select %p286, %s27, 1
        %s288 = smul.addr %s287, 4
        %s289 = scalar_lea.vmem %s0, %s288
        %p290 = pneg %p55
        %p291 = pneg %p52
        %p292 = pneg %p76
        %p293 = pneg %p73
        %p294 = pneg %p97
        %p295 = pneg %p94
        %p296 = pneg %p118
        %p297 = pneg %p115
        %p298 = pneg %p139
        %p299 = pneg %p136
        %p300 = pneg %p160
        %p301 = pneg %p157
        %p302 = pneg %p190
        %p303 = pneg %p187
        %s304 = sand.u32 %s177, 1
        %s305 = scalar_lea.sflag [#allocation8], %s304
        %s306 = sand.u32 %s177, 1
        %s307 = smul.addr %s306, 8
        %s308 = scalar_lea.vmem [#allocation12], %s307
        %p309 = scmp.lt.s32.totalorder %s27, 1
        %s310 = scalar_select %p309, %s27, 1
        %s311 = smul.addr %s310, 4
        %s312 = scalar_lea.vmem %s0, %s311
        %p313 = scmp.eq.s32.totalorder %s26, 2
        %s314 = scalar_select %p313, %s27, 0
        %v315 = vlaneseq
        %v316 = vshrl.u32 %v315, 7
        %s317 = smul.u32 %s27, 8
        %v318 = vstv %s317
        %v319 = vadd.s32 %v316, %v318
        %vm320 = vcmp.lt.s32.totalorder %v319, 16
        %v321 = vsel %vm320, 1, 0
        %v322 = vcvt.s32.f32 %v321
        %v323 = vld [vmem:[%s312] sm:$0xf]
        %v324 = vld [vmem:[#allocation6] sm:$0xff]
        %v325 = vld [vmem:[#allocation6 + $0x8] sm:$0xff]
        %v326 = vld [vmem:[#allocation6 + $0x10] sm:$0xff]
        %v327 = vld [vmem:[#allocation6 + $0x18] sm:$0xff]
        %v328 = vld [vmem:[#allocation6 + $0x20] sm:$0xff]
        %v329 = vld [vmem:[#allocation6 + $0x28] sm:$0xff]
        %v330 = vld [vmem:[#allocation6 + $0x30] sm:$0xff]
        %v331 = vld [vmem:[#allocation6 + $0x38] sm:$0xff]
        %v332 = vld [vmem:[#allocation6 + $0x40] sm:$0xff]
        %v333 = vld [vmem:[#allocation6 + $0x48] sm:$0xff]
        %v334 = vld [vmem:[#allocation6 + $0x50] sm:$0xff]
        %v335 = vld [vmem:[#allocation6 + $0x58] sm:$0xff]
        %v336 = vld [vmem:[#allocation6 + $0x60] sm:$0xff]
        %v337 = vld [vmem:[#allocation6 + $0x68] sm:$0xff]
        %v338 = vld [vmem:[#allocation6 + $0x70] sm:$0xff]
        %v339 = vld [vmem:[#allocation6 + $0x78] sm:$0xff]
        %v340 = vld [vmem:[%s2] ss:$8 sm:$0x3]
        %v342 = vperm.slane %v340, 0
        %v343 = vperm.slane %v340, 1
        %v362 = vunpack.c.l.b16 %v324
        %v363 = vunpack.c.h.b16 %v324
        %v364 = vunpack.c.l.b16 %v325
        %v365 = vunpack.c.h.b16 %v325
        %v366 = vunpack.c.l.b16 %v326
        %v367 = vunpack.c.h.b16 %v326
        %v368 = vunpack.c.l.b16 %v327
        %v369 = vunpack.c.h.b16 %v327
        %v370 = vunpack.c.l.b16 %v328
        %v371 = vunpack.c.h.b16 %v328
        %v372 = vunpack.c.l.b16 %v329
        %v373 = vunpack.c.h.b16 %v329
        %v374 = vunpack.c.l.b16 %v330
        %v375 = vunpack.c.h.b16 %v330
        %v376 = vunpack.c.l.b16 %v331
        %v377 = vunpack.c.h.b16 %v331
        %v378 = vunpack.c.l.b16 %v332
        %v379 = vunpack.c.h.b16 %v332
        %v380 = vunpack.c.l.b16 %v333
        %v381 = vunpack.c.h.b16 %v333
        %v382 = vunpack.c.l.b16 %v334
        %v383 = vunpack.c.h.b16 %v334
        %v384 = vunpack.c.l.b16 %v335
        %v385 = vunpack.c.h.b16 %v335
        %v386 = vunpack.c.l.b16 %v336
        %v387 = vunpack.c.h.b16 %v336
        %v388 = vunpack.c.l.b16 %v337
        %v389 = vunpack.c.h.b16 %v337
        %v390 = vunpack.c.l.b16 %v338
        %v391 = vunpack.c.h.b16 %v338
        %v392 = vunpack.c.l.b16 %v339
        %v393 = vunpack.c.h.b16 %v339
        %v394 = vpack.c.b16 %v364, %v362
        %v395 = vpack.c.b16 %v365, %v363
        %v396 = vpack.c.b16 %v368, %v366
        %v397 = vpack.c.b16 %v369, %v367
        %v398 = vpack.c.b16 %v372, %v370
        %v399 = vpack.c.b16 %v373, %v371
        %v400 = vpack.c.b16 %v376, %v374
        %v401 = vpack.c.b16 %v377, %v375
        %v402 = vpack.c.b16 %v380, %v378
        %v403 = vpack.c.b16 %v381, %v379
        %v404 = vpack.c.b16 %v384, %v382
        %v405 = vpack.c.b16 %v385, %v383
        %v406 = vpack.c.b16 %v388, %v386
        %v407 = vpack.c.b16 %v389, %v387
        %v408 = vpack.c.b16 %v392, %v390
        %v409 = vpack.c.b16 %v393, %v391
        %426 = vmatpush.bf16.msra.mxu0 %v408
        %427 = vmatpush.bf16.msra.mxu0 %v406
        %428 = vmatpush.bf16.msra.mxu0 %v404
        %429 = vmatpush.bf16.msra.mxu0 %v402
        %430 = vmatpush.bf16.msra.mxu0 %v400
        %431 = vmatpush.bf16.msra.mxu0 %v398
        %432 = vmatpush.bf16.msra.mxu0 %v396
        %433 = vmatpush.bf16.msra.mxu0 %v394
        %434 = vmatmul.bf16.gmra.mxu0 %v323
        %v435 = vpop.f32.mrf.mxu0
        %v436 = vadd.f32 %v342, %v435
        %v437 = vpop.f32.mrf.mxu0
        %438 = vdwg.mxu0
        %439 = vmatpush.bf16.msra.mxu0 %v409
        %440 = vmatpush.bf16.msra.mxu0 %v407
        %441 = vmatpush.bf16.msra.mxu0 %v405
        %442 = vmatpush.bf16.msra.mxu0 %v403
        %443 = vmatpush.bf16.msra.mxu0 %v401
        %444 = vmatpush.bf16.msra.mxu0 %v399
        %445 = vmatpush.bf16.msra.mxu0 %v397
        %446 = vmatpush.bf16.msra.mxu0 %v395
        %447 = vmatmul.bf16.gmra.mxu0 %v323
        %v448 = vpop.f32.mrf.mxu0
        %v449 = vadd.f32 %v343, %v448
        %v450 = vpop.f32.mrf.mxu0
        %451 = vdwg.mxu0
        %p452 = scmp.eq.s32.totalorder %s26, 0
        // Predicated region
        $region57: #{dense_autoencoder_forward.1} parent=43 // pred_check
          %p453 = pneg %p452
        $region58: #{dense_autoencoder_forward.1} parent=43 // pred_check_branch
          %455 = sbr.rel (%p453) target = $region60
        $region59: #{dense_autoencoder_forward.1} parent=43 // pred_region
          %p456 = scmp.eq.s32.totalorder %s27, 0
          // Predicated region
          $region61: #{dense_autoencoder_forward.1} parent=59 // pred_check
            %p457 = pneg %p456
          $region62: #{dense_autoencoder_forward.1} parent=59 // pred_check_branch
            %459 = sbr.rel (%p457) target = $region64
          $region63: #{dense_autoencoder_forward.1} parent=59 // pred_region
            %460 = vst [vmem:[#allocation2] sm:$0xf] 0.0
          $region64: #{dense_autoencoder_forward.1} parent=59 // pred_fallthru
            _
          %v461 = vmul.f32 %v436, %v322
          %v462 = vmul.f32 %v449, %v322
          %v463 = vld [vmem:[#allocation2] ss:$2 sm:$0x3]
          %v464 = vrot.slane %v461, 4
          %v465 = vadd.f32 %v461, %v464
          %v466 = vrot.slane %v465, 2
          %v467 = vadd.f32 %v465, %v466
          %v468 = vrot.slane %v467, 1
          %v469 = vadd.f32 %v467, %v468
          %v470 = vrot.slane %v462, 4
          %v471 = vadd.f32 %v462, %v470
          %v472 = vrot.slane %v471, 2
          %v473 = vadd.f32 %v471, %v472
          %v474 = vrot.slane %v473, 1
          %v475 = vadd.f32 %v473, %v474
          %v478 = vrot.slane %v475, 7
          %vm479 = vcmask 1040384
          %v480 = vsel %vm479, %v469, %v478
          %v482 = vadd.f32 %v463, %v480
          %v483 = vlaneseq
          %vm484 = vcmp.ge.s32.totalorder %v483, 0
          %vm485 = vcmp.lt.s32.totalorder %v483, 256
          %vm486 = vmand %vm484, %vm485
          %487 = vst.msk [vmem:[#allocation2] ss:$2 sm:$0x3] %vm486, %v482
          %s488 = scalar_lea.vmem [#allocation2], 1
          %v489 = vld [vmem:[%s488] ss:$2 sm:$0x3]
          %v490 = vmul.f32 %v461, %v436
          %v491 = vmul.f32 %v462, %v449
          %v492 = vrot.slane %v490, 4
          %v493 = vadd.f32 %v490, %v492
          %v494 = vrot.slane %v493, 2
          %v495 = vadd.f32 %v493, %v494
          %v496 = vrot.slane %v495, 1
          %v497 = vadd.f32 %v495, %v496
          %v498 = vrot.slane %v491, 4
          %v499 = vadd.f32 %v491, %v498
          %v500 = vrot.slane %v499, 2
          %v501 = vadd.f32 %v499, %v500
          %v502 = vrot.slane %v501, 1
          %v503 = vadd.f32 %v501, %v502
          %v506 = vrot.slane %v503, 7
          %v507 = vsel %vm479, %v497, %v506
          %v509 = vadd.f32 %v489, %v507
          %510 = vst.msk [vmem:[%s488] ss:$2 sm:$0x3] %vm486, %v509
        $region60: #{dense_autoencoder_forward.1} parent=43 // pred_fallthru
          _
        %p511 = scmp.eq.s32.totalorder %s26, 1
        // Predicated region
        $region65: #{dense_autoencoder_forward.1} parent=43 // pred_check
          %p512 = pneg %p511
        $region66: #{dense_autoencoder_forward.1} parent=43 // pred_check_branch
          %514 = sbr.rel (%p512) target = $region68
        $region67: #{dense_autoencoder_forward.1} parent=43 // pred_region
          %p515 = scmp.eq.s32.totalorder %s27, 0
          // Predicated region
          $region69: #{dense_autoencoder_forward.1} parent=67 // pred_check
            %p516 = pneg %p515
          $region70: #{dense_autoencoder_forward.1} parent=67 // pred_check_branch
            %518 = sbr.rel (%p516) target = $region72
          $region71: #{dense_autoencoder_forward.1} parent=67 // pred_region
            %v519 = vld [vmem:[#allocation2] ss:$2 sm:$0x3]
            %v520 = vmul.f32 %v519, 0.0625
            %s521 = scalar_lea.vmem [#allocation2], 1
            %v522 = vld [vmem:[%s521] ss:$2 sm:$0x3]
            %v523 = vmul.f32 %v522, 0.0625
            %v524 = vmul.f32 %v520, %v520
            %v525 = vsub.f32 %v523, %v524
            %s526 = scalar_lea.vmem %s2, 1
            %v527 = vld [vmem:[%s526] ss:$8 sm:$0x3]
            %v528 = vadd.f32 %v525, 1e-05
            %v529 = vrsqrt.pop %v528
            %v530 = vmul.f32 %v529, %v528
            %v531 = vmul.f32 %v530, %v529
            %v532 = vmul.f32 0.5, %v531
            %v533 = vsub.f32 1.5, %v532
            %v534 = vmul.f32 %v529, %v533
            %vm535 = vweird.f32 %v528
            %vm536 = vweird.f32 %v529
            %vm537 = vmor %vm535, %vm536
            %v538 = vsel %vm537, %v529, %v534
            %v539 = vmul.f32 %v527, %v538
            %v540 = vlaneseq
            %vm541 = vcmp.ge.s32.totalorder %v540, 0
            %vm542 = vcmp.lt.s32.totalorder %v540, 256
            %vm543 = vmand %vm541, %vm542
            %544 = vst.msk [vmem:[#allocation4] ss:$2 sm:$0x3] %vm543, %v539
            %s545 = scalar_lea.vmem %s2, 2
            %v546 = vld [vmem:[%s545] ss:$8 sm:$0x3]
            %v547 = vmul.f32 %v520, %v539
            %v548 = vsub.f32 %v546, %v547
            %s549 = scalar_lea.vmem [#allocation4], 1
            %550 = vst.msk [vmem:[%s549] ss:$2 sm:$0x3] %vm543, %v548
            %551 = vst [vmem:[#allocation3] sm:$0xf] 0.0
          $region72: #{dense_autoencoder_forward.1} parent=67 // pred_fallthru
            _
          %v552 = vld [vmem:[#allocation4] ss:$2 sm:$0x3]
          %v554 = vperm.slane %v552, 0
          %v555 = vperm.slane %v552, 1
          %v558 = vmul.f32 %v436, %v554
          %v559 = vmul.f32 %v449, %v555
          %s560 = scalar_lea.vmem [#allocation4], 1
          %v561 = vld [vmem:[%s560] ss:$2 sm:$0x3]
          %v563 = vperm.slane %v561, 0
          %v564 = vperm.slane %v561, 1
          %v567 = vadd.f32 %v558, %v563
          %v568 = vadd.f32 %v559, %v564
          %v569 = vmax.f32 %v567, 0.0
          %v570 = vmax.f32 %v568, 0.0
          %v571 = vpack.c.bf16 %v569, %v569
          %v572 = vpack.c.bf16 %v570, %v570
          %v573 = vld [vmem:[#allocation9] sm:$0xff]
          %v574 = vld [vmem:[#allocation9 + $0x8] sm:$0xff]
          %v575 = vld [vmem:[#allocation9 + $0x10] sm:$0xff]
          %v576 = vld [vmem:[#allocation9 + $0x18] sm:$0xff]
          %v577 = vld [vmem:[#allocation9 + $0x20] sm:$0xff]
          %v578 = vld [vmem:[#allocation9 + $0x28] sm:$0xff]
          %v579 = vld [vmem:[#allocation9 + $0x30] sm:$0xff]
          %v580 = vld [vmem:[#allocation9 + $0x38] sm:$0xff]
          %v581 = vld [vmem:[#allocation9 + $0x40] sm:$0xff]
          %v582 = vld [vmem:[#allocation9 + $0x48] sm:$0xff]
          %v583 = vld [vmem:[#allocation9 + $0x50] sm:$0xff]
          %v584 = vld [vmem:[#allocation9 + $0x58] sm:$0xff]
          %v585 = vld [vmem:[#allocation9 + $0x60] sm:$0xff]
          %v586 = vld [vmem:[#allocation9 + $0x68] sm:$0xff]
          %v587 = vld [vmem:[#allocation9 + $0x70] sm:$0xff]
          %v588 = vld [vmem:[#allocation9 + $0x78] sm:$0xff]
          %v589 = vld [vmem:[#allocation9 + $0x80] sm:$0xff]
          %v590 = vld [vmem:[#allocation9 + $0x88] sm:$0xff]
          %v591 = vld [vmem:[#allocation9 + $0x90] sm:$0xff]
          %v592 = vld [vmem:[#allocation9 + $0x98] sm:$0xff]
          %v593 = vld [vmem:[#allocation9 + $0xa0] sm:$0xff]
          %v594 = vld [vmem:[#allocation9 + $0xa8] sm:$0xff]
          %v595 = vld [vmem:[#allocation9 + $0xb0] sm:$0xff]
          %v596 = vld [vmem:[#allocation9 + $0xb8] sm:$0xff]
          %v597 = vld [vmem:[#allocation9 + $0xc0] sm:$0xff]
          %v598 = vld [vmem:[#allocation9 + $0xc8] sm:$0xff]
          %v599 = vld [vmem:[#allocation9 + $0xd0] sm:$0xff]
          %v600 = vld [vmem:[#allocation9 + $0xd8] sm:$0xff]
          %v601 = vld [vmem:[#allocation9 + $0xe0] sm:$0xff]
          %v602 = vld [vmem:[#allocation9 + $0xe8] sm:$0xff]
          %v603 = vld [vmem:[#allocation9 + $0xf0] sm:$0xff]
          %v604 = vld [vmem:[#allocation9 + $0xf8] sm:$0xff]
          %s605 = scalar_lea.vmem %s2, 3
          %v606 = vld [vmem:[%s605] ss:$8 sm:$0x3]
          %v608 = vperm.slane %v606, 0
          %v609 = vperm.slane %v606, 1
          %v644 = vunpack.c.l.b16 %v573
          %v645 = vunpack.c.h.b16 %v573
          %v646 = vunpack.c.l.b16 %v574
          %v647 = vunpack.c.h.b16 %v574
          %v648 = vunpack.c.l.b16 %v575
          %v649 = vunpack.c.h.b16 %v575
          %v650 = vunpack.c.l.b16 %v576
          %v651 = vunpack.c.h.b16 %v576
          %v652 = vunpack.c.l.b16 %v577
          %v653 = vunpack.c.h.b16 %v577
          %v654 = vunpack.c.l.b16 %v578
          %v655 = vunpack.c.h.b16 %v578
          %v656 = vunpack.c.l.b16 %v579
          %v657 = vunpack.c.h.b16 %v579
          %v658 = vunpack.c.l.b16 %v580
          %v659 = vunpack.c.h.b16 %v580
          %v660 = vunpack.c.l.b16 %v581
          %v661 = vunpack.c.h.b16 %v581
          %v662 = vunpack.c.l.b16 %v582
          %v663 = vunpack.c.h.b16 %v582
          %v664 = vunpack.c.l.b16 %v583
          %v665 = vunpack.c.h.b16 %v583
          %v666 = vunpack.c.l.b16 %v584
          %v667 = vunpack.c.h.b16 %v584
          %v668 = vunpack.c.l.b16 %v585
          %v669 = vunpack.c.h.b16 %v585
          %v670 = vunpack.c.l.b16 %v586
          %v671 = vunpack.c.h.b16 %v586
          %v672 = vunpack.c.l.b16 %v587
          %v673 = vunpack.c.h.b16 %v587
          %v674 = vunpack.c.l.b16 %v588
          %v675 = vunpack.c.h.b16 %v588
          %v676 = vunpack.c.l.b16 %v589
          %v677 = vunpack.c.h.b16 %v589
          %v678 = vunpack.c.l.b16 %v590
          %v679 = vunpack.c.h.b16 %v590
          %v680 = vunpack.c.l.b16 %v591
          %v681 = vunpack.c.h.b16 %v591
          %v682 = vunpack.c.l.b16 %v592
          %v683 = vunpack.c.h.b16 %v592
          %v684 = vunpack.c.l.b16 %v593
          %v685 = vunpack.c.h.b16 %v593
          %v686 = vunpack.c.l.b16 %v594
          %v687 = vunpack.c.h.b16 %v594
          %v688 = vunpack.c.l.b16 %v595
          %v689 = vunpack.c.h.b16 %v595
          %v690 = vunpack.c.l.b16 %v596
          %v691 = vunpack.c.h.b16 %v596
          %v692 = vunpack.c.l.b16 %v597
          %v693 = vunpack.c.h.b16 %v597
          %v694 = vunpack.c.l.b16 %v598
          %v695 = vunpack.c.h.b16 %v598
          %v696 = vunpack.c.l.b16 %v599
          %v697 = vunpack.c.h.b16 %v599
          %v698 = vunpack.c.l.b16 %v600
          %v699 = vunpack.c.h.b16 %v600
          %v700 = vunpack.c.l.b16 %v601
          %v701 = vunpack.c.h.b16 %v601
          %v702 = vunpack.c.l.b16 %v602
          %v703 = vunpack.c.h.b16 %v602
          %v704 = vunpack.c.l.b16 %v603
          %v705 = vunpack.c.h.b16 %v603
          %v706 = vunpack.c.l.b16 %v604
          %v707 = vunpack.c.h.b16 %v604
          %v708 = vpack.c.b16 %v646, %v644
          %v709 = vpack.c.b16 %v647, %v645
          %v710 = vpack.c.b16 %v650, %v648
          %v711 = vpack.c.b16 %v651, %v649
          %v712 = vpack.c.b16 %v654, %v652
          %v713 = vpack.c.b16 %v655, %v653
          %v714 = vpack.c.b16 %v658, %v656
          %v715 = vpack.c.b16 %v659, %v657
          %v716 = vpack.c.b16 %v662, %v660
          %v717 = vpack.c.b16 %v663, %v661
          %v718 = vpack.c.b16 %v666, %v664
          %v719 = vpack.c.b16 %v667, %v665
          %v720 = vpack.c.b16 %v670, %v668
          %v721 = vpack.c.b16 %v671, %v669
          %v722 = vpack.c.b16 %v674, %v672
          %v723 = vpack.c.b16 %v675, %v673
          %v724 = vpack.c.b16 %v678, %v676
          %v725 = vpack.c.b16 %v679, %v677
          %v726 = vpack.c.b16 %v682, %v680
          %v727 = vpack.c.b16 %v683, %v681
          %v728 = vpack.c.b16 %v686, %v684
          %v729 = vpack.c.b16 %v687, %v685
          %v730 = vpack.c.b16 %v690, %v688
          %v731 = vpack.c.b16 %v691, %v689
          %v732 = vpack.c.b16 %v694, %v692
          %v733 = vpack.c.b16 %v695, %v693
          %v734 = vpack.c.b16 %v698, %v696
          %v735 = vpack.c.b16 %v699, %v697
          %v736 = vpack.c.b16 %v702, %v700
          %v737 = vpack.c.b16 %v703, %v701
          %v738 = vpack.c.b16 %v706, %v704
          %v739 = vpack.c.b16 %v707, %v705
          %772 = vmatpush.bf16.msra.mxu0 %v722
          %773 = vmatpush.bf16.msra.mxu0 %v720
          %774 = vmatpush.bf16.msra.mxu0 %v718
          %775 = vmatpush.bf16.msra.mxu0 %v716
          %776 = vmatpush.bf16.msra.mxu0 %v714
          %777 = vmatpush.bf16.msra.mxu0 %v712
          %778 = vmatpush.bf16.msra.mxu0 %v710
          %779 = vmatpush.bf16.msra.mxu0 %v708
          %780 = vmatmul.bf16.gmra.mxu0 %v571
          %v781 = vpop.f32.mrf.mxu0
          %v782 = vadd.f32 %v608, %v781
          %v783 = vpop.f32.mrf.mxu0
          %784 = vdwg.mxu0
          %785 = vmatpush.bf16.msra.mxu0 %v738
          %786 = vmatpush.bf16.msra.mxu0 %v736
          %787 = vmatpush.bf16.msra.mxu0 %v734
          %788 = vmatpush.bf16.msra.mxu0 %v732
          %789 = vmatpush.bf16.msra.mxu0 %v730
          %790 = vmatpush.bf16.msra.mxu0 %v728
          %791 = vmatpush.bf16.msra.mxu0 %v726
          %792 = vmatpush.bf16.msra.mxu0 %v724
          %793 = vmatmul.bf16.gmra.mxu0 %v572
          %v794 = vpop.f32.mrf.mxu0
          %v795 = vadd.f32 %v782, %v794
          %v796 = vpop.f32.mrf.mxu0
          %797 = vdwg.mxu0
          %798 = vmatpush.bf16.msra.mxu0 %v723
          %799 = vmatpush.bf16.msra.mxu0 %v721
          %800 = vmatpush.bf16.msra.mxu0 %v719
          %801 = vmatpush.bf16.msra.mxu0 %v717
          %802 = vmatpush.bf16.msra.mxu0 %v715
          %803 = vmatpush.bf16.msra.mxu0 %v713
          %804 = vmatpush.bf16.msra.mxu0 %v711
          %805 = vmatpush.bf16.msra.mxu0 %v709
          %806 = vmatmul.bf16.gmra.mxu0 %v571
          %v807 = vpop.f32.mrf.mxu0
          %v808 = vadd.f32 %v609, %v807
          %v809 = vpop.f32.mrf.mxu0
          %810 = vdwg.mxu0
          %811 = vmatpush.bf16.msra.mxu0 %v739
          %812 = vmatpush.bf16.msra.mxu0 %v737
          %813 = vmatpush.bf16.msra.mxu0 %v735
          %814 = vmatpush.bf16.msra.mxu0 %v733
          %815 = vmatpush.bf16.msra.mxu0 %v731
          %816 = vmatpush.bf16.msra.mxu0 %v729
          %817 = vmatpush.bf16.msra.mxu0 %v727
          %818 = vmatpush.bf16.msra.mxu0 %v725
          %819 = vmatmul.bf16.gmra.mxu0 %v572
          %v820 = vpop.f32.mrf.mxu0
          %v821 = vadd.f32 %v808, %v820
          %v822 = vpop.f32.mrf.mxu0
          %823 = vdwg.mxu0
          %v824 = vmul.f32 %v795, %v322
          %v825 = vmul.f32 %v821, %v322
          %v826 = vld [vmem:[#allocation3] ss:$2 sm:$0x3]
          %v827 = vrot.slane %v824, 4
          %v828 = vadd.f32 %v824, %v827
          %v829 = vrot.slane %v828, 2
          %v830 = vadd.f32 %v828, %v829
          %v831 = vrot.slane %v830, 1
          %v832 = vadd.f32 %v830, %v831
          %v833 = vrot.slane %v825, 4
          %v834 = vadd.f32 %v825, %v833
          %v835 = vrot.slane %v834, 2
          %v836 = vadd.f32 %v834, %v835
          %v837 = vrot.slane %v836, 1
          %v838 = vadd.f32 %v836, %v837
          %v841 = vrot.slane %v838, 7
          %vm842 = vcmask 1040384
          %v843 = vsel %vm842, %v832, %v841
          %v845 = vadd.f32 %v826, %v843
          %v846 = vlaneseq
          %vm847 = vcmp.ge.s32.totalorder %v846, 0
          %vm848 = vcmp.lt.s32.totalorder %v846, 256
          %vm849 = vmand %vm847, %vm848
          %850 = vst.msk [vmem:[#allocation3] ss:$2 sm:$0x3] %vm849, %v845
          %s851 = scalar_lea.vmem [#allocation3], 1
          %v852 = vld [vmem:[%s851] ss:$2 sm:$0x3]
          %v853 = vmul.f32 %v824, %v795
          %v854 = vmul.f32 %v825, %v821
          %v855 = vrot.slane %v853, 4
          %v856 = vadd.f32 %v853, %v855
          %v857 = vrot.slane %v856, 2
          %v858 = vadd.f32 %v856, %v857
          %v859 = vrot.slane %v858, 1
          %v860 = vadd.f32 %v858, %v859
          %v861 = vrot.slane %v854, 4
          %v862 = vadd.f32 %v854, %v861
          %v863 = vrot.slane %v862, 2
          %v864 = vadd.f32 %v862, %v863
          %v865 = vrot.slane %v864, 1
          %v866 = vadd.f32 %v864, %v865
          %v869 = vrot.slane %v866, 7
          %v870 = vsel %vm842, %v860, %v869
          %v872 = vadd.f32 %v852, %v870
          %873 = vst.msk [vmem:[%s851] ss:$2 sm:$0x3] %vm849, %v872
        $region68: #{dense_autoencoder_forward.1} parent=43 // pred_fallthru
          _
        %p874 = scmp.eq.s32.totalorder %s26, 2
        // Predicated region
        $region73: #{dense_autoencoder_forward.1} parent=43 // pred_check
          %p875 = pneg %p874
        $region74: #{dense_autoencoder_forward.1} parent=43 // pred_check_branch
          %877 = sbr.rel (%p875) target = $region76
        $region75: #{dense_autoencoder_forward.1} parent=43 // pred_region
          %p878 = scmp.eq.s32.totalorder %s27, 0
          // Predicated region
          $region77: #{dense_autoencoder_forward.1} parent=75 // pred_check
            %p879 = pneg %p878
          $region78: #{dense_autoencoder_forward.1} parent=75 // pred_check_branch
            %881 = sbr.rel (%p879) target = $region80
          $region79: #{dense_autoencoder_forward.1} parent=75 // pred_region
            %v882 = vld [vmem:[#allocation3] ss:$2 sm:$0x3]
            %v883 = vmul.f32 %v882, 0.0625
            %s884 = scalar_lea.vmem [#allocation3], 1
            %v885 = vld [vmem:[%s884] ss:$2 sm:$0x3]
            %v886 = vmul.f32 %v885, 0.0625
            %v887 = vmul.f32 %v883, %v883
            %v888 = vsub.f32 %v886, %v887
            %s889 = scalar_lea.vmem %s2, 4
            %v890 = vld [vmem:[%s889] ss:$8 sm:$0x3]
            %v891 = vadd.f32 %v888, 1e-05
            %v892 = vrsqrt.pop %v891
            %v893 = vmul.f32 %v892, %v891
            %v894 = vmul.f32 %v893, %v892
            %v895 = vmul.f32 0.5, %v894
            %v896 = vsub.f32 1.5, %v895
            %v897 = vmul.f32 %v892, %v896
            %vm898 = vweird.f32 %v891
            %vm899 = vweird.f32 %v892
            %vm900 = vmor %vm898, %vm899
            %v901 = vsel %vm900, %v892, %v897
            %v902 = vmul.f32 %v890, %v901
            %v903 = vlaneseq
            %vm904 = vcmp.ge.s32.totalorder %v903, 0
            %vm905 = vcmp.lt.s32.totalorder %v903, 256
            %vm906 = vmand %vm904, %vm905
            %907 = vst.msk [vmem:[#allocation5] ss:$2 sm:$0x3] %vm906, %v902
            %s908 = scalar_lea.vmem %s2, 5
            %v909 = vld [vmem:[%s908] ss:$8 sm:$0x3]
            %v910 = vmul.f32 %v883, %v902
            %v911 = vsub.f32 %v909, %v910
            %s912 = scalar_lea.vmem [#allocation5], 1
            %913 = vst.msk [vmem:[%s912] ss:$2 sm:$0x3] %vm906, %v911
          $region80: #{dense_autoencoder_forward.1} parent=75 // pred_fallthru
            _
          %v914 = vld [vmem:[#allocation4] ss:$2 sm:$0x3]
          %v916 = vperm.slane %v914, 0
          %v917 = vperm.slane %v914, 1
          %v920 = vmul.f32 %v436, %v916
          %v921 = vmul.f32 %v449, %v917
          %s922 = scalar_lea.vmem [#allocation4], 1
          %v923 = vld [vmem:[%s922] ss:$2 sm:$0x3]
          %v925 = vperm.slane %v923, 0
          %v926 = vperm.slane %v923, 1
          %v929 = vadd.f32 %v920, %v925
          %v930 = vadd.f32 %v921, %v926
          %v931 = vmax.f32 %v929, 0.0
          %v932 = vmax.f32 %v930, 0.0
          %v933 = vpack.c.bf16 %v931, %v931
          %v934 = vpack.c.bf16 %v932, %v932
          %v935 = vld [vmem:[#allocation9] sm:$0xff]
          %v936 = vld [vmem:[#allocation9 + $0x8] sm:$0xff]
          %v937 = vld [vmem:[#allocation9 + $0x10] sm:$0xff]
          %v938 = vld [vmem:[#allocation9 + $0x18] sm:$0xff]
          %v939 = vld [vmem:[#allocation9 + $0x20] sm:$0xff]
          %v940 = vld [vmem:[#allocation9 + $0x28] sm:$0xff]
          %v941 = vld [vmem:[#allocation9 + $0x30] sm:$0xff]
          %v942 = vld [vmem:[#allocation9 + $0x38] sm:$0xff]
          %v943 = vld [vmem:[#allocation9 + $0x40] sm:$0xff]
          %v944 = vld [vmem:[#allocation9 + $0x48] sm:$0xff]
          %v945 = vld [vmem:[#allocation9 + $0x50] sm:$0xff]
          %v946 = vld [vmem:[#allocation9 + $0x58] sm:$0xff]
          %v947 = vld [vmem:[#allocation9 + $0x60] sm:$0xff]
          %v948 = vld [vmem:[#allocation9 + $0x68] sm:$0xff]
          %v949 = vld [vmem:[#allocation9 + $0x70] sm:$0xff]
          %v950 = vld [vmem:[#allocation9 + $0x78] sm:$0xff]
          %v951 = vld [vmem:[#allocation9 + $0x80] sm:$0xff]
          %v952 = vld [vmem:[#allocation9 + $0x88] sm:$0xff]
          %v953 = vld [vmem:[#allocation9 + $0x90] sm:$0xff]
          %v954 = vld [vmem:[#allocation9 + $0x98] sm:$0xff]
          %v955 = vld [vmem:[#allocation9 + $0xa0] sm:$0xff]
          %v956 = vld [vmem:[#allocation9 + $0xa8] sm:$0xff]
          %v957 = vld [vmem:[#allocation9 + $0xb0] sm:$0xff]
          %v958 = vld [vmem:[#allocation9 + $0xb8] sm:$0xff]
          %v959 = vld [vmem:[#allocation9 + $0xc0] sm:$0xff]
          %v960 = vld [vmem:[#allocation9 + $0xc8] sm:$0xff]
          %v961 = vld [vmem:[#allocation9 + $0xd0] sm:$0xff]
          %v962 = vld [vmem:[#allocation9 + $0xd8] sm:$0xff]
          %v963 = vld [vmem:[#allocation9 + $0xe0] sm:$0xff]
          %v964 = vld [vmem:[#allocation9 + $0xe8] sm:$0xff]
          %v965 = vld [vmem:[#allocation9 + $0xf0] sm:$0xff]
          %v966 = vld [vmem:[#allocation9 + $0xf8] sm:$0xff]
          %s967 = scalar_lea.vmem %s2, 3
          %v968 = vld [vmem:[%s967] ss:$8 sm:$0x3]
          %v970 = vperm.slane %v968, 0
          %v971 = vperm.slane %v968, 1
          %v1006 = vunpack.c.l.b16 %v935
          %v1007 = vunpack.c.h.b16 %v935
          %v1008 = vunpack.c.l.b16 %v936
          %v1009 = vunpack.c.h.b16 %v936
          %v1010 = vunpack.c.l.b16 %v937
          %v1011 = vunpack.c.h.b16 %v937
          %v1012 = vunpack.c.l.b16 %v938
          %v1013 = vunpack.c.h.b16 %v938
          %v1014 = vunpack.c.l.b16 %v939
          %v1015 = vunpack.c.h.b16 %v939
          %v1016 = vunpack.c.l.b16 %v940
          %v1017 = vunpack.c.h.b16 %v940
          %v1018 = vunpack.c.l.b16 %v941
          %v1019 = vunpack.c.h.b16 %v941
          %v1020 = vunpack.c.l.b16 %v942
          %v1021 = vunpack.c.h.b16 %v942
          %v1022 = vunpack.c.l.b16 %v943
          %v1023 = vunpack.c.h.b16 %v943
          %v1024 = vunpack.c.l.b16 %v944
          %v1025 = vunpack.c.h.b16 %v944
          %v1026 = vunpack.c.l.b16 %v945
          %v1027 = vunpack.c.h.b16 %v945
          %v1028 = vunpack.c.l.b16 %v946
          %v1029 = vunpack.c.h.b16 %v946
          %v1030 = vunpack.c.l.b16 %v947
          %v1031 = vunpack.c.h.b16 %v947
          %v1032 = vunpack.c.l.b16 %v948
          %v1033 = vunpack.c.h.b16 %v948
          %v1034 = vunpack.c.l.b16 %v949
          %v1035 = vunpack.c.h.b16 %v949
          %v1036 = vunpack.c.l.b16 %v950
          %v1037 = vunpack.c.h.b16 %v950
          %v1038 = vunpack.c.l.b16 %v951
          %v1039 = vunpack.c.h.b16 %v951
          %v1040 = vunpack.c.l.b16 %v952
          %v1041 = vunpack.c.h.b16 %v952
          %v1042 = vunpack.c.l.b16 %v953
          %v1043 = vunpack.c.h.b16 %v953
          %v1044 = vunpack.c.l.b16 %v954
          %v1045 = vunpack.c.h.b16 %v954
          %v1046 = vunpack.c.l.b16 %v955
          %v1047 = vunpack.c.h.b16 %v955
          %v1048 = vunpack.c.l.b16 %v956
          %v1049 = vunpack.c.h.b16 %v956
          %v1050 = vunpack.c.l.b16 %v957
          %v1051 = vunpack.c.h.b16 %v957
          %v1052 = vunpack.c.l.b16 %v958
          %v1053 = vunpack.c.h.b16 %v958
          %v1054 = vunpack.c.l.b16 %v959
          %v1055 = vunpack.c.h.b16 %v959
          %v1056 = vunpack.c.l.b16 %v960
          %v1057 = vunpack.c.h.b16 %v960
          %v1058 = vunpack.c.l.b16 %v961
          %v1059 = vunpack.c.h.b16 %v961
          %v1060 = vunpack.c.l.b16 %v962
          %v1061 = vunpack.c.h.b16 %v962
          %v1062 = vunpack.c.l.b16 %v963
          %v1063 = vunpack.c.h.b16 %v963
          %v1064 = vunpack.c.l.b16 %v964
          %v1065 = vunpack.c.h.b16 %v964
          %v1066 = vunpack.c.l.b16 %v965
          %v1067 = vunpack.c.h.b16 %v965
          %v1068 = vunpack.c.l.b16 %v966
          %v1069 = vunpack.c.h.b16 %v966
          %v1070 = vpack.c.b16 %v1008, %v1006
          %v1071 = vpack.c.b16 %v1009, %v1007
          %v1072 = vpack.c.b16 %v1012, %v1010
          %v1073 = vpack.c.b16 %v1013, %v1011
          %v1074 = vpack.c.b16 %v1016, %v1014
          %v1075 = vpack.c.b16 %v1017, %v1015
          %v1076 = vpack.c.b16 %v1020, %v1018
          %v1077 = vpack.c.b16 %v1021, %v1019
          %v1078 = vpack.c.b16 %v1024, %v1022
          %v1079 = vpack.c.b16 %v1025, %v1023
          %v1080 = vpack.c.b16 %v1028, %v1026
          %v1081 = vpack.c.b16 %v1029, %v1027
          %v1082 = vpack.c.b16 %v1032, %v1030
          %v1083 = vpack.c.b16 %v1033, %v1031
          %v1084 = vpack.c.b16 %v1036, %v1034
          %v1085 = vpack.c.b16 %v1037, %v1035
          %v1086 = vpack.c.b16 %v1040, %v1038
          %v1087 = vpack.c.b16 %v1041, %v1039
          %v1088 = vpack.c.b16 %v1044, %v1042
          %v1089 = vpack.c.b16 %v1045, %v1043
          %v1090 = vpack.c.b16 %v1048, %v1046
          %v1091 = vpack.c.b16 %v1049, %v1047
          %v1092 = vpack.c.b16 %v1052, %v1050
          %v1093 = vpack.c.b16 %v1053, %v1051
          %v1094 = vpack.c.b16 %v1056, %v1054
          %v1095 = vpack.c.b16 %v1057, %v1055
          %v1096 = vpack.c.b16 %v1060, %v1058
          %v1097 = vpack.c.b16 %v1061, %v1059
          %v1098 = vpack.c.b16 %v1064, %v1062
          %v1099 = vpack.c.b16 %v1065, %v1063
          %v1100 = vpack.c.b16 %v1068, %v1066
          %v1101 = vpack.c.b16 %v1069, %v1067
          %1134 = vmatpush.bf16.msra.mxu0 %v1084
          %1135 = vmatpush.bf16.msra.mxu0 %v1082
          %1136 = vmatpush.bf16.msra.mxu0 %v1080
          %1137 = vmatpush.bf16.msra.mxu0 %v1078
          %1138 = vmatpush.bf16.msra.mxu0 %v1076
          %1139 = vmatpush.bf16.msra.mxu0 %v1074
          %1140 = vmatpush.bf16.msra.mxu0 %v1072
          %1141 = vmatpush.bf16.msra.mxu0 %v1070
          %1142 = vmatmul.bf16.gmra.mxu0 %v933
          %v1143 = vpop.f32.mrf.mxu0
          %v1144 = vadd.f32 %v970, %v1143
          %v1145 = vpop.f32.mrf.mxu0
          %1146 = vdwg.mxu0
          %1147 = vmatpush.bf16.msra.mxu0 %v1100
          %1148 = vmatpush.bf16.msra.mxu0 %v1098
          %1149 = vmatpush.bf16.msra.mxu0 %v1096
          %1150 = vmatpush.bf16.msra.mxu0 %v1094
          %1151 = vmatpush.bf16.msra.mxu0 %v1092
          %1152 = vmatpush.bf16.msra.mxu0 %v1090
          %1153 = vmatpush.bf16.msra.mxu0 %v1088
          %1154 = vmatpush.bf16.msra.mxu0 %v1086
          %1155 = vmatmul.bf16.gmra.mxu0 %v934
          %v1156 = vpop.f32.mrf.mxu0
          %v1157 = vadd.f32 %v1144, %v1156
          %v1158 = vpop.f32.mrf.mxu0
          %1159 = vdwg.mxu0
          %1160 = vmatpush.bf16.msra.mxu0 %v1085
          %1161 = vmatpush.bf16.msra.mxu0 %v1083
          %1162 = vmatpush.bf16.msra.mxu0 %v1081
          %1163 = vmatpush.bf16.msra.mxu0 %v1079
          %1164 = vmatpush.bf16.msra.mxu0 %v1077
          %1165 = vmatpush.bf16.msra.mxu0 %v1075
          %1166 = vmatpush.bf16.msra.mxu0 %v1073
          %1167 = vmatpush.bf16.msra.mxu0 %v1071
          %1168 = vmatmul.bf16.gmra.mxu0 %v933
          %v1169 = vpop.f32.mrf.mxu0
          %v1170 = vadd.f32 %v971, %v1169
          %v1171 = vpop.f32.mrf.mxu0
          %1172 = vdwg.mxu0
          %1173 = vmatpush.bf16.msra.mxu0 %v1101
          %1174 = vmatpush.bf16.msra.mxu0 %v1099
          %1175 = vmatpush.bf16.msra.mxu0 %v1097
          %1176 = vmatpush.bf16.msra.mxu0 %v1095
          %1177 = vmatpush.bf16.msra.mxu0 %v1093
          %1178 = vmatpush.bf16.msra.mxu0 %v1091
          %1179 = vmatpush.bf16.msra.mxu0 %v1089
          %1180 = vmatpush.bf16.msra.mxu0 %v1087
          %1181 = vmatmul.bf16.gmra.mxu0 %v934
          %v1182 = vpop.f32.mrf.mxu0
          %v1183 = vadd.f32 %v1170, %v1182
          %v1184 = vpop.f32.mrf.mxu0
          %1185 = vdwg.mxu0
          %v1186 = vld [vmem:[#allocation5] ss:$2 sm:$0x3]
          %v1188 = vperm.slane %v1186, 0
          %v1189 = vperm.slane %v1186, 1
          %v1192 = vmul.f32 %v1157, %v1188
          %v1193 = vmul.f32 %v1183, %v1189
          %s1194 = scalar_lea.vmem [#allocation5], 1
          %v1195 = vld [vmem:[%s1194] ss:$2 sm:$0x3]
          %v1197 = vperm.slane %v1195, 0
          %v1198 = vperm.slane %v1195, 1
          %v1201 = vadd.f32 %v1192, %v1197
          %v1202 = vadd.f32 %v1193, %v1198
          %v1203 = vmax.f32 %v1201, 0.0
          %v1204 = vmax.f32 %v1202, 0.0
          %v1205 = vpack.c.bf16 %v1203, %v1203
          %v1206 = vpack.c.bf16 %v1204, %v1204
          %v1207 = vld [vmem:[#allocation11] sm:$0xf]
          %v1208 = vld [vmem:[#allocation11 + $0x4] sm:$0xf]
          %v1209 = vld [vmem:[#allocation11 + $0x8] sm:$0xf]
          %v1210 = vld [vmem:[#allocation11 + $0xc] sm:$0xf]
          %v1211 = vld [vmem:[#allocation11 + $0x10] sm:$0xf]
          %v1212 = vld [vmem:[#allocation11 + $0x14] sm:$0xf]
          %v1213 = vld [vmem:[#allocation11 + $0x18] sm:$0xf]
          %v1214 = vld [vmem:[#allocation11 + $0x1c] sm:$0xf]
          %v1215 = vld [vmem:[#allocation11 + $0x20] sm:$0xf]
          %v1216 = vld [vmem:[#allocation11 + $0x24] sm:$0xf]
          %v1217 = vld [vmem:[#allocation11 + $0x28] sm:$0xf]
          %v1218 = vld [vmem:[#allocation11 + $0x2c] sm:$0xf]
          %v1219 = vld [vmem:[#allocation11 + $0x30] sm:$0xf]
          %v1220 = vld [vmem:[#allocation11 + $0x34] sm:$0xf]
          %v1221 = vld [vmem:[#allocation11 + $0x38] sm:$0xf]
          %v1222 = vld [vmem:[#allocation11 + $0x3c] sm:$0xf]
          %v1223 = vld [vmem:[#allocation11 + $0x40] sm:$0xf]
          %v1224 = vld [vmem:[#allocation11 + $0x44] sm:$0xf]
          %v1225 = vld [vmem:[#allocation11 + $0x48] sm:$0xf]
          %v1226 = vld [vmem:[#allocation11 + $0x4c] sm:$0xf]
          %v1227 = vld [vmem:[#allocation11 + $0x50] sm:$0xf]
          %v1228 = vld [vmem:[#allocation11 + $0x54] sm:$0xf]
          %v1229 = vld [vmem:[#allocation11 + $0x58] sm:$0xf]
          %v1230 = vld [vmem:[#allocation11 + $0x5c] sm:$0xf]
          %v1231 = vld [vmem:[#allocation11 + $0x60] sm:$0xf]
          %v1232 = vld [vmem:[#allocation11 + $0x64] sm:$0xf]
          %v1233 = vld [vmem:[#allocation11 + $0x68] sm:$0xf]
          %v1234 = vld [vmem:[#allocation11 + $0x6c] sm:$0xf]
          %v1235 = vld [vmem:[#allocation11 + $0x70] sm:$0xf]
          %v1236 = vld [vmem:[#allocation11 + $0x74] sm:$0xf]
          %v1237 = vld [vmem:[#allocation11 + $0x78] sm:$0xf]
          %v1238 = vld [vmem:[#allocation11 + $0x7c] sm:$0xf]
          %v1239 = vld [vmem:[%s5] sm:$0x1]
          %v1241 = vperm.slane %v1239, 0
          %v1275 = vunpack.c.l.b16 %v1207
          %v1276 = vunpack.c.l.b16 %v1208
          %v1277 = vunpack.c.l.b16 %v1209
          %v1278 = vunpack.c.l.b16 %v1210
          %v1279 = vunpack.c.l.b16 %v1211
          %v1280 = vunpack.c.l.b16 %v1212
          %v1281 = vunpack.c.l.b16 %v1213
          %v1282 = vunpack.c.l.b16 %v1214
          %v1283 = vunpack.c.l.b16 %v1215
          %v1284 = vunpack.c.l.b16 %v1216
          %v1285 = vunpack.c.l.b16 %v1217
          %v1286 = vunpack.c.l.b16 %v1218
          %v1287 = vunpack.c.l.b16 %v1219
          %v1288 = vunpack.c.l.b16 %v1220
          %v1289 = vunpack.c.l.b16 %v1221
          %v1290 = vunpack.c.l.b16 %v1222
          %v1291 = vunpack.c.l.b16 %v1223
          %v1292 = vunpack.c.l.b16 %v1224
          %v1293 = vunpack.c.l.b16 %v1225
          %v1294 = vunpack.c.l.b16 %v1226
          %v1295 = vunpack.c.l.b16 %v1227
          %v1296 = vunpack.c.l.b16 %v1228
          %v1297 = vunpack.c.l.b16 %v1229
          %v1298 = vunpack.c.l.b16 %v1230
          %v1299 = vunpack.c.l.b16 %v1231
          %v1300 = vunpack.c.l.b16 %v1232
          %v1301 = vunpack.c.l.b16 %v1233
          %v1302 = vunpack.c.l.b16 %v1234
          %v1303 = vunpack.c.l.b16 %v1235
          %v1304 = vunpack.c.l.b16 %v1236
          %v1305 = vunpack.c.l.b16 %v1237
          %v1306 = vunpack.c.l.b16 %v1238
          %v1307 = vpack.c.b16 %v1276, %v1275
          %v1308 = vpack.c.b16 %v1278, %v1277
          %v1309 = vpack.c.b16 %v1280, %v1279
          %v1310 = vpack.c.b16 %v1282, %v1281
          %v1311 = vpack.c.b16 %v1284, %v1283
          %v1312 = vpack.c.b16 %v1286, %v1285
          %v1313 = vpack.c.b16 %v1288, %v1287
          %v1314 = vpack.c.b16 %v1290, %v1289
          %v1315 = vpack.c.b16 %v1292, %v1291
          %v1316 = vpack.c.b16 %v1294, %v1293
          %v1317 = vpack.c.b16 %v1296, %v1295
          %v1318 = vpack.c.b16 %v1298, %v1297
          %v1319 = vpack.c.b16 %v1300, %v1299
          %v1320 = vpack.c.b16 %v1302, %v1301
          %v1321 = vpack.c.b16 %v1304, %v1303
          %v1322 = vpack.c.b16 %v1306, %v1305
          %1339 = vmatpush.bf16.msra.mxu0 %v1314
          %1340 = vmatpush.bf16.msra.mxu0 %v1313
          %1341 = vmatpush.bf16.msra.mxu0 %v1312
          %1342 = vmatpush.bf16.msra.mxu0 %v1311
          %1343 = vmatpush.bf16.msra.mxu0 %v1310
          %1344 = vmatpush.bf16.msra.mxu0 %v1309
          %1345 = vmatpush.bf16.msra.mxu0 %v1308
          %1346 = vmatpush.bf16.msra.mxu0 %v1307
          %1347 = vmatmul.bf16.gmra.mxu0 %v1205
          %v1348 = vpop.f32.mrf.mxu0
          %v1349 = vadd.f32 %v1241, %v1348
          %v1350 = vpop.f32.mrf.mxu0
          %1351 = vdwg.mxu0
          %1352 = vmatpush.bf16.msra.mxu0 %v1322
          %1353 = vmatpush.bf16.msra.mxu0 %v1321
          %1354 = vmatpush.bf16.msra.mxu0 %v1320
          %1355 = vmatpush.bf16.msra.mxu0 %v1319
          %1356 = vmatpush.bf16.msra.mxu0 %v1318
          %1357 = vmatpush.bf16.msra.mxu0 %v1317
          %1358 = vmatpush.bf16.msra.mxu0 %v1316
          %1359 = vmatpush.bf16.msra.mxu0 %v1315
          %1360 = vmatmul.bf16.gmra.mxu0 %v1206
          %v1361 = vpop.f32.mrf.mxu0
          %v1362 = vadd.f32 %v1349, %v1361
          %v1363 = vpop.f32.mrf.mxu0
          %1364 = vdwg.mxu0
          %v1365 = vmax.f32 %v1362, 0.0
          %1366 = vst [vmem:[%s308] sm:$0xff] %v1365
        $region76: #{dense_autoencoder_forward.1} parent=43 // pred_fallthru
          _
        %s1367 = sand.u32 %s177, 1
        %s1368 = scalar_lea.sflag [#allocation8], %s1367
        %s1369 = sand.u32 %s177, 1
        %s1370 = smul.addr %s1369, 8
        %s1371 = scalar_lea.vmem [#allocation12], %s1370
        // Predicated region
        $region81: #{dense_autoencoder_forward.1} parent=43 // pred_check
          %p1372 = pneg %p187
        $region82: #{dense_autoencoder_forward.1} parent=43 // pred_check_branch
          %1374 = sbr.rel (%p1372) target = $region84
        $region83: #{dense_autoencoder_forward.1} parent=43 // pred_region
          %p1375 = scmp.eq.s32.totalorder %s26, 2
          %s1376 = scalar_select %p1375, %s27, 0
          %1378 = vsyncadd %s1368, 0
          %s1379 = smul.addr %s1376, 8
          %s1380 = scalar_lea.hbm %s6, %s1379
          %s1382 = sshll.u32 %s1371, 4
          %s1383 = int_to_ptr.vmem [resolvable:$true] %s1382
          %s1384 = sshll.u32 %s1380, 4
          %s1385 = int_to_ptr.hbm [resolvable:$true] %s1384
          %1387 = dma.vmem_to_hbm [thread:$0]  %s1383, 128, %s1385, %s1368
        $region84: #{dense_autoencoder_forward.1} parent=43 // pred_fallthru
          _
      $region44: #{dense_autoencoder_forward.1} parent=5 // pred_fallthru
        _
      %p1388 = scmp.le.s32.totalorder 2, %s17
      // Predicated region
      $region85: #{dense_autoencoder_forward.1} parent=5 // pred_check
        %p1389 = pneg %p1388
      $region86: #{dense_autoencoder_forward.1} parent=5 // pred_check_branch
        %1391 = sbr.rel (%p1389) target = $region88
      $region87: #{dense_autoencoder_forward.1} parent=5 // pred_region
        %s1392 = ssub.s32 %s17, 2
        // Predicated region
        $region89: #{dense_autoencoder_forward.1} parent=87 // pred_check
          %p1393 = pneg %p193
        $region90: #{dense_autoencoder_forward.1} parent=87 // pred_check_branch
          %1395 = sbr.rel (%p1393) target = $region92
        $region91: #{dense_autoencoder_forward.1} parent=87 // pred_region
          %s1396 = sand.u32 %s178, 1
          %s1397 = scalar_lea.sflag [#allocation8], %s1396
          %s1398 = sand.u32 %s178, 1
          %s1399 = smul.addr %s1398, 8
          %s1400 = scalar_lea.vmem [#allocation12], %s1399
          %1402 = dma.done %s1397, 128
        $region92: #{dense_autoencoder_forward.1} parent=87 // pred_fallthru
          _
      $region88: #{dense_autoencoder_forward.1} parent=5 // pred_fallthru
        _
    $region6: #{dense_autoencoder_forward.1} parent=1 // loop_footer
      %s21 = sadd.s32 1, %s17
    $region7: #{dense_autoencoder_forward.1} parent=1 // loop_footer_branch
      %16 = sbr.rel target = $region3
    $region8: #{dense_autoencoder_forward.1} parent=1 // loop_exit
      _
    %1403 = vsyncpa [#allocation7], 1
    %s1404 = scalar_lea.sflag [#allocation7], 1
    %1405 = vsyncpa %s1404, 1
    %1406 = vsyncpa [#allocation10], 1
    %1407 = vsyncpa [#allocation8], 1
    %s1408 = scalar_lea.sflag [#allocation8], 1
    %1409 = vsyncpa %s1408, 1

</llo_original>
